<compile_context>
chip_gen: v5e
topology: v5e:2x2
jax: 0.10.0
libtpu: 0.0.40
codegen_flags: <defaults>
</compile_context>

<pallas_src>
import functools

import jax
import jax.numpy as jnp
from jax import lax
from jax.experimental import pallas as pl
from jax.experimental.pallas import tpu as pltpu


def _fused_kernel(B, H, W, Wp, Cin, C1, C2,
                  x_ref, w1_ref, b1_ref, w2_ref, b2_ref, mask_ref,
                  out_ref, hflat_ref):
    M = H * Wp                      # extended pixel axis per sample (lanes)
    L = (H + 3) * Wp                # flattened padded-plane length
    pad_lo = Wp + 1                 # top pad row + left pad of first data row

    w1 = w1_ref[...]                # (C1, 9*Cin) bf16
    w2 = w2_ref[...]                # (C2, 9*C1)  bf16
    b1 = b1_ref[...]                # (C1, 1) f32
    b2 = b2_ref[...]                # (C2, 1) f32

    # Lanes with (m % Wp) >= W are "garbage" columns created by the row-stride
    # slice trick; they must be zeroed before they feed conv2.
    col = lax.broadcasted_iota(jnp.int32, (1, M), 1)
    valid = (col % Wp) < W          # (1, M) bool

    for b in range(B):              # B is small & static; unrolled
        # ---- conv1: 9 accumulating MXU matmuls, RHS = contiguous lane slices ----
        acc1 = jnp.zeros((C1, M), jnp.float32)
        for t in range(9):
            dy, dx = t // 3, t % 3
            off = dy * Wp + dx
            x_t = x_ref[b, :, off:off + M]                    # (Cin, M) bf16
            w_t = w1[:, t * Cin:(t + 1) * Cin]                # (C1, Cin) bf16
            acc1 = acc1 + jnp.dot(w_t, x_t, preferred_element_type=jnp.float32)

        # bias + ReLU + Dropout2d per-(sample, channel) scaled mask (all f32);
        # zero the garbage columns so they cannot leak into conv2.
        h = jnp.maximum(acc1 + b1, 0.0) * mask_ref[b]          # (C1, M)
        h = jnp.where(valid, h, 0.0)

        # ---- zero-padded conv1 activation, flattened with row stride Wp ----
        # Layout: row 0 = top pad, rows 1..H = [0, h_row, pad...], rows H+1.. = 0.
        # Only three wide stores: two small zero strips + one full-lane data slab.
        hflat_ref[:, 0:pad_lo] = jnp.zeros((C1, pad_lo), jnp.bfloat16)
        hflat_ref[:, pad_lo + M:L] = jnp.zeros((C1, L - pad_lo - M), jnp.bfloat16)
        hflat_ref[:, pad_lo:pad_lo + M] = h.astype(jnp.bfloat16)

        # ---- conv2: 9 accumulating MXU matmuls from hflat lane slices ----
        acc2 = jnp.zeros((C2, M), jnp.float32)
        for t in range(9):
            dy, dx = t // 3, t % 3
            off = dy * Wp + dx
            h_t = hflat_ref[:, off:off + M]                    # (C1, M) bf16
            w_t = w2[:, t * C1:(t + 1) * C1]                   # (C2, C1) bf16
            acc2 = acc2 + jnp.dot(w_t, h_t, preferred_element_type=jnp.float32)

        # Lane-dense flattened-NCHW output store; M = H*Wp is a multiple of 128.
        out_ref[b] = (acc2 + b2).astype(out_ref.dtype)


def spatial_dropout_net(x_nchw, w1, b1, w2, b2, mask):
    """Forward pass.

    x_nchw: (N, Cin, H, W) float32        (PyTorch NCHW)
    w1:     (C1, Cin, 3, 3), b1: (C1,)    (PyTorch OIHW)
    w2:     (C2, C1, 3, 3),  b2: (C2,)
    mask:   (N, C1) float32 — Dropout2d mask, already scaled by 1/(1-p)
    returns (N, C2, H, W) float32
    """
    N, Cin, H, W = x_nchw.shape
    C1 = w1.shape[0]
    C2 = w2.shape[0]

    # Row stride of the padded planes. Widen W+2 slightly so H*Wp is a multiple
    # of 128 (unmasked full-lane stores); fall back to W+2 if not found nearby.
    Wp = W + 2
    for cand in range(W + 2, W + 2 + 16):
        if (H * cand) % 128 == 0:
            Wp = cand
            break
    M = H * Wp
    L = (H + 3) * Wp                 # 1 top pad row + H data rows + 2 bottom pad rows

    # Glue: NCHW is kept as-is (channels on sublanes, pixels on lanes); pad the
    # spatial plane and flatten it so every conv tap is a contiguous lane slice.
    xpad = jnp.pad(x_nchw, ((0, 0), (0, 0), (1, 2), (1, Wp - W - 1)))
    xflat = xpad.reshape(N, Cin, L).astype(jnp.bfloat16)

    # OIHW -> (Cout, 9*Cin) with K index (dy*3+dx)*Cin + ci matching the kernel.
    w1_t = jnp.transpose(w1, (0, 2, 3, 1)).reshape(C1, 9 * Cin).astype(jnp.bfloat16)
    w2_t = jnp.transpose(w2, (0, 2, 3, 1)).reshape(C2, 9 * C1).astype(jnp.bfloat16)
    b1_2d = b1.reshape(C1, 1).astype(jnp.float32)
    b2_2d = b2.reshape(C2, 1).astype(jnp.float32)
    mask3 = mask.reshape(N, C1, 1).astype(jnp.float32)

    # At most 2 grid steps: collapse the batch into each step (amortizes per-step
    # pipeline overhead on v5e/v6e) while keeping a 2-wide "parallel" axis so both
    # v7x TensorCores get work when N is even.
    if N % 2 == 0 and N >= 2:
        num_steps = 2
    else:
        num_steps = 1
    B = N // num_steps

    kernel = functools.partial(_fused_kernel, B, H, W, Wp, Cin, C1, C2)
    out_ext = pl.pallas_call(
        kernel,
        out_shape=jax.ShapeDtypeStruct((N, C2, M), x_nchw.dtype),
        grid_spec=pltpu.PrefetchScalarGridSpec(
            num_scalar_prefetch=0,
            grid=(num_steps,),
            in_specs=[
                pl.BlockSpec((B, Cin, L), lambda n: (n, 0, 0)),
                pl.BlockSpec((C1, 9 * Cin), lambda n: (0, 0)),
                pl.BlockSpec((C1, 1), lambda n: (0, 0)),
                pl.BlockSpec((C2, 9 * C1), lambda n: (0, 0)),
                pl.BlockSpec((C2, 1), lambda n: (0, 0)),
                pl.BlockSpec((B, C1, 1), lambda n: (n, 0, 0)),
            ],
            out_specs=pl.BlockSpec((B, C2, M), lambda n: (n, 0, 0)),
            scratch_shapes=[
                pltpu.VMEM((C1, L), jnp.bfloat16),   # padded conv1 activation plane
            ],
        ),
        compiler_params=pltpu.CompilerParams(dimension_semantics=("parallel",)),
    )(xflat, w1_t, b1_2d, w2_t, b2_2d, mask3)

    # Flattened NCHW with Wp-strided rows -> drop the garbage columns. Cheap slice,
    # no transpose needed.
    out = out_ext.reshape(N, C2, H, Wp)[:, :, :, :W]
    return out

    # TODO(synk): for realistic H/W/C sizes, tile over H with a 2-row halo (and set
    # pltpu.CompilerParams(vmem_limit_bytes=...)) so the padded planes fit v7x's
    # 64 MiB VMEM, and feed both TCs with a (batch x H-tile) parallel grid.


def _reference(x_nchw, w1, b1, w2, b2, mask):
    dn = ("NCHW", "OIHW", "NCHW")
    h = jax.lax.conv_general_dilated(x_nchw, w1, (1, 1), "SAME",
                                     dimension_numbers=dn)
    h = h + b1.reshape(1, -1, 1, 1)
    h = jnp.maximum(h, 0.0)
    h = h * mask.reshape(mask.shape[0], mask.shape[1], 1, 1)
    y = jax.lax.conv_general_dilated(h, w2, (1, 1), "SAME",
                                     dimension_numbers=dn)
    return y + b2.reshape(1, -1, 1, 1)


if __name__ == "__main__":
    N, Cin, H, W = 2, 4, 16, 16
    C1, C2 = 16, 32
    dropout_rate = 0.5

    key = jax.random.PRNGKey(0)
    kx, kw1, kb1, kw2, kb2, kd = jax.random.split(key, 6)

    x = jax.random.normal(kx, (N, Cin, H, W), dtype=jnp.float32)
    # deterministic synthetic parameters (PyTorch shapes: OIHW weights, per-channel biases)
    w1 = 0.1 * jax.random.normal(kw1, (C1, Cin, 3, 3), dtype=jnp.float32)
    b1 = 0.1 * jax.random.normal(kb1, (C1,), dtype=jnp.float32)
    w2 = 0.1 * jax.random.normal(kw2, (C2, C1, 3, 3), dtype=jnp.float32)
    b2 = 0.1 * jax.random.normal(kb2, (C2,), dtype=jnp.float32)

    # Dropout2d (training mode): drop whole channels per (sample, channel),
    # survivors scaled by 1/(1-p). Mask generated deterministically host-side.
    keep = jax.random.bernoulli(kd, p=1.0 - dropout_rate, shape=(N, C1))
    mask = keep.astype(jnp.float32) / (1.0 - dropout_rate)

    out = jax.block_until_ready(spatial_dropout_net(x, w1, b1, w2, b2, mask))
    ref = jax.block_until_ready(_reference(x, w1, b1, w2, b2, mask))

    assert out.shape == (N, C2, H, W), out.shape
    assert bool(jnp.all(jnp.isfinite(out)))
    assert bool(jnp.allclose(out, ref, atol=2e-2, rtol=2e-2)), "mismatch vs reference"

    print("KERNEL_OK")
</pallas_src>

<mosaic_0001>
module attributes {stable_mosaic.version = 11 : i64} {
  func.func @_fused_kernel(%arg0: i32, %arg1: memref<1x4x456xbf16, #tpu.memory_space<vmem>>, %arg2: memref<16x36xbf16, #tpu.memory_space<vmem>>, %arg3: memref<16x1xf32, #tpu.memory_space<vmem>>, %arg4: memref<32x144xbf16, #tpu.memory_space<vmem>>, %arg5: memref<32x1xf32, #tpu.memory_space<vmem>>, %arg6: memref<1x16x1xf32, #tpu.memory_space<vmem>>, %arg7: memref<1x32x384xf32, #tpu.memory_space<vmem>>, %arg8: memref<16x456xbf16, #tpu.memory_space<vmem>>) attributes {dimension_semantics = [#tpu.dimension_semantics<parallel>], iteration_bounds = array<i64: 2>, scalar_prefetch = 0 : i64, scratch_operands = 1 : i64, tpu.core_type = #tpu.core_type<tc>, window_params = [{transform_indices = @transform_0, window_bounds = array<i64: 1, 4, 456>}, {pipeline_mode = #tpu.pipeline_mode<synchronous>, transform_indices = @transform_1, window_bounds = array<i64: 16, 36>}, {pipeline_mode = #tpu.pipeline_mode<synchronous>, transform_indices = @transform_2, window_bounds = array<i64: 16, 1>}, {pipeline_mode = #tpu.pipeline_mode<synchronous>, transform_indices = @transform_3, window_bounds = array<i64: 32, 144>}, {pipeline_mode = #tpu.pipeline_mode<synchronous>, transform_indices = @transform_4, window_bounds = array<i64: 32, 1>}, {transform_indices = @transform_5, window_bounds = array<i64: 1, 16, 1>}, {transform_indices = @transform_6, window_bounds = array<i64: 1, 32, 384>}]} {
    %c0 = arith.constant 0 : index
    %c0_0 = arith.constant 0 : index
    %0 = vector.load %arg2[%c0, %c0_0] : memref<16x36xbf16, #tpu.memory_space<vmem>>, vector<16x36xbf16>
    %c0_1 = arith.constant 0 : index
    %c0_2 = arith.constant 0 : index
    %1 = vector.load %arg4[%c0_1, %c0_2] : memref<32x144xbf16, #tpu.memory_space<vmem>>, vector<32x144xbf16>
    %c0_3 = arith.constant 0 : index
    %c0_4 = arith.constant 0 : index
    %2 = vector.load %arg3[%c0_3, %c0_4] : memref<16x1xf32, #tpu.memory_space<vmem>>, vector<16x1xf32>
    %c0_5 = arith.constant 0 : index
    %c0_6 = arith.constant 0 : index
    %3 = vector.load %arg5[%c0_5, %c0_6] : memref<32x1xf32, #tpu.memory_space<vmem>>, vector<32x1xf32>
    %4 = tpu.iota {dimensions = array<i32: 1>} : vector<1x384xi32>
    %c24_i32 = arith.constant 24 : i32
    %c0_i32 = arith.constant 0 : i32
    %5 = arith.cmpi eq, %c24_i32, %c0_i32 : i32
    %c1_i32 = arith.constant 1 : i32
    %6 = arith.select %5, %c1_i32, %c24_i32 : i32
    %7 = vector.broadcast %6 : i32 to vector<1x384xi32>
    %8 = arith.remsi %4, %7 : vector<1x384xi32>
    %c0_i32_7 = arith.constant 0 : i32
    %9 = vector.broadcast %c0_i32_7 : i32 to vector<1x384xi32>
    %10 = arith.cmpi ne, %8, %9 : vector<1x384xi32>
    %c0_i32_8 = arith.constant 0 : i32
    %11 = vector.broadcast %c0_i32_8 : i32 to vector<1x384xi32>
    %12 = arith.cmpi slt, %8, %11 : vector<1x384xi32>
    %c0_i32_9 = arith.constant 0 : i32
    %13 = arith.cmpi slt, %6, %c0_i32_9 : i32
    %14 = vector.broadcast %13 : i1 to vector<1x384xi1>
    %15 = vector.broadcast %14 : vector<1x384xi1> to vector<1x384xi1>
    %16 = arith.xori %12, %15 : vector<1x384xi1>
    %17 = arith.andi %16, %10 : vector<1x384xi1>
    %18 = vector.broadcast %6 : i32 to vector<1x384xi32>
    %19 = arith.addi %8, %18 : vector<1x384xi32>
    %20 = arith.select %17, %19, %8 : vector<1x384xi1>, vector<1x384xi32>
    %c16_i32 = arith.constant 16 : i32
    %21 = vector.broadcast %c16_i32 : i32 to vector<1x384xi32>
    %22 = arith.cmpi slt, %20, %21 : vector<1x384xi32>
    %cst = arith.constant 0.000000e+00 : f32
    %23 = vector.broadcast %cst : f32 to vector<16x384xf32>
    %c0_10 = arith.constant 0 : index
    %c0_11 = arith.constant 0 : index
    %c0_12 = arith.constant 0 : index
    %24 = vector.load %arg1[%c0_10, %c0_11, %c0_12] : memref<1x4x456xbf16, #tpu.memory_space<vmem>>, vector<1x4x384xbf16>
    %25 = vector.shape_cast %24 : vector<1x4x384xbf16> to vector<4x384xbf16>
    %26 = vector.extract_strided_slice %0 {offsets = [0, 0], sizes = [16, 4], strides = [1, 1]} : vector<16x36xbf16> to vector<16x4xbf16>
    %cst_13 = arith.constant dense<0.000000e+00> : vector<16x384xf32>
    %27 = tpu.matmul %26, %25, %cst_13 {dimension_numbers = #tpu.dot_dimension_numbers<[1], [0], [0], [1], [0, 0, 1, 1], [], []>} : vector<16x4xbf16>, vector<4x384xbf16>, vector<16x384xf32> -> vector<16x384xf32>
    %28 = arith.addf %23, %27 : vector<16x384xf32>
    %c0_14 = arith.constant 0 : index
    %c0_15 = arith.constant 0 : index
    %c1 = arith.constant 1 : index
    %29 = vector.load %arg1[%c0_14, %c0_15, %c1] : memref<1x4x456xbf16, #tpu.memory_space<vmem>>, vector<1x4x384xbf16>
    %30 = vector.shape_cast %29 : vector<1x4x384xbf16> to vector<4x384xbf16>
    %31 = vector.extract_strided_slice %0 {offsets = [0, 4], sizes = [16, 4], strides = [1, 1]} : vector<16x36xbf16> to vector<16x4xbf16>
    %cst_16 = arith.constant dense<0.000000e+00> : vector<16x384xf32>
    %32 = tpu.matmul %31, %30, %cst_16 {dimension_numbers = #tpu.dot_dimension_numbers<[1], [0], [0], [1], [0, 0, 1, 1], [], []>} : vector<16x4xbf16>, vector<4x384xbf16>, vector<16x384xf32> -> vector<16x384xf32>
    %33 = arith.addf %28, %32 : vector<16x384xf32>
    %c0_17 = arith.constant 0 : index
    %c0_18 = arith.constant 0 : index
    %c2 = arith.constant 2 : index
    %34 = vector.load %arg1[%c0_17, %c0_18, %c2] : memref<1x4x456xbf16, #tpu.memory_space<vmem>>, vector<1x4x384xbf16>
    %35 = vector.shape_cast %34 : vector<1x4x384xbf16> to vector<4x384xbf16>
    %36 = vector.extract_strided_slice %0 {offsets = [0, 8], sizes = [16, 4], strides = [1, 1]} : vector<16x36xbf16> to vector<16x4xbf16>
    %cst_19 = arith.constant dense<0.000000e+00> : vector<16x384xf32>
    %37 = tpu.matmul %36, %35, %cst_19 {dimension_numbers = #tpu.dot_dimension_numbers<[1], [0], [0], [1], [0, 0, 1, 1], [], []>} : vector<16x4xbf16>, vector<4x384xbf16>, vector<16x384xf32> -> vector<16x384xf32>
    %38 = arith.addf %33, %37 : vector<16x384xf32>
    %c0_20 = arith.constant 0 : index
    %c0_21 = arith.constant 0 : index
    %c24 = arith.constant 24 : index
    %39 = vector.load %arg1[%c0_20, %c0_21, %c24] : memref<1x4x456xbf16, #tpu.memory_space<vmem>>, vector<1x4x384xbf16>
    %40 = vector.shape_cast %39 : vector<1x4x384xbf16> to vector<4x384xbf16>
    %41 = vector.extract_strided_slice %0 {offsets = [0, 12], sizes = [16, 4], strides = [1, 1]} : vector<16x36xbf16> to vector<16x4xbf16>
    %cst_22 = arith.constant dense<0.000000e+00> : vector<16x384xf32>
    %42 = tpu.matmul %41, %40, %cst_22 {dimension_numbers = #tpu.dot_dimension_numbers<[1], [0], [0], [1], [0, 0, 1, 1], [], []>} : vector<16x4xbf16>, vector<4x384xbf16>, vector<16x384xf32> -> vector<16x384xf32>
    %43 = arith.addf %38, %42 : vector<16x384xf32>
    %c0_23 = arith.constant 0 : index
    %c0_24 = arith.constant 0 : index
    %c25 = arith.constant 25 : index
    %44 = vector.load %arg1[%c0_23, %c0_24, %c25] : memref<1x4x456xbf16, #tpu.memory_space<vmem>>, vector<1x4x384xbf16>
    %45 = vector.shape_cast %44 : vector<1x4x384xbf16> to vector<4x384xbf16>
    %46 = vector.extract_strided_slice %0 {offsets = [0, 16], sizes = [16, 4], strides = [1, 1]} : vector<16x36xbf16> to vector<16x4xbf16>
    %cst_25 = arith.constant dense<0.000000e+00> : vector<16x384xf32>
    %47 = tpu.matmul %46, %45, %cst_25 {dimension_numbers = #tpu.dot_dimension_numbers<[1], [0], [0], [1], [0, 0, 1, 1], [], []>} : vector<16x4xbf16>, vector<4x384xbf16>, vector<16x384xf32> -> vector<16x384xf32>
    %48 = arith.addf %43, %47 : vector<16x384xf32>
    %c0_26 = arith.constant 0 : index
    %c0_27 = arith.constant 0 : index
    %c26 = arith.constant 26 : index
    %49 = vector.load %arg1[%c0_26, %c0_27, %c26] : memref<1x4x456xbf16, #tpu.memory_space<vmem>>, vector<1x4x384xbf16>
    %50 = vector.shape_cast %49 : vector<1x4x384xbf16> to vector<4x384xbf16>
    %51 = vector.extract_strided_slice %0 {offsets = [0, 20], sizes = [16, 4], strides = [1, 1]} : vector<16x36xbf16> to vector<16x4xbf16>
    %cst_28 = arith.constant dense<0.000000e+00> : vector<16x384xf32>
    %52 = tpu.matmul %51, %50, %cst_28 {dimension_numbers = #tpu.dot_dimension_numbers<[1], [0], [0], [1], [0, 0, 1, 1], [], []>} : vector<16x4xbf16>, vector<4x384xbf16>, vector<16x384xf32> -> vector<16x384xf32>
    %53 = arith.addf %48, %52 : vector<16x384xf32>
    %c0_29 = arith.constant 0 : index
    %c0_30 = arith.constant 0 : index
    %c48 = arith.constant 48 : index
    %54 = vector.load %arg1[%c0_29, %c0_30, %c48] : memref<1x4x456xbf16, #tpu.memory_space<vmem>>, vector<1x4x384xbf16>
    %55 = vector.shape_cast %54 : vector<1x4x384xbf16> to vector<4x384xbf16>
    %56 = vector.extract_strided_slice %0 {offsets = [0, 24], sizes = [16, 4], strides = [1, 1]} : vector<16x36xbf16> to vector<16x4xbf16>
    %cst_31 = arith.constant dense<0.000000e+00> : vector<16x384xf32>
    %57 = tpu.matmul %56, %55, %cst_31 {dimension_numbers = #tpu.dot_dimension_numbers<[1], [0], [0], [1], [0, 0, 1, 1], [], []>} : vector<16x4xbf16>, vector<4x384xbf16>, vector<16x384xf32> -> vector<16x384xf32>
    %58 = arith.addf %53, %57 : vector<16x384xf32>
    %c0_32 = arith.constant 0 : index
    %c0_33 = arith.constant 0 : index
    %c49 = arith.constant 49 : index
    %59 = vector.load %arg1[%c0_32, %c0_33, %c49] : memref<1x4x456xbf16, #tpu.memory_space<vmem>>, vector<1x4x384xbf16>
    %60 = vector.shape_cast %59 : vector<1x4x384xbf16> to vector<4x384xbf16>
    %61 = vector.extract_strided_slice %0 {offsets = [0, 28], sizes = [16, 4], strides = [1, 1]} : vector<16x36xbf16> to vector<16x4xbf16>
    %cst_34 = arith.constant dense<0.000000e+00> : vector<16x384xf32>
    %62 = tpu.matmul %61, %60, %cst_34 {dimension_numbers = #tpu.dot_dimension_numbers<[1], [0], [0], [1], [0, 0, 1, 1], [], []>} : vector<16x4xbf16>, vector<4x384xbf16>, vector<16x384xf32> -> vector<16x384xf32>
    %63 = arith.addf %58, %62 : vector<16x384xf32>
    %c0_35 = arith.constant 0 : index
    %c0_36 = arith.constant 0 : index
    %c50 = arith.constant 50 : index
    %64 = vector.load %arg1[%c0_35, %c0_36, %c50] : memref<1x4x456xbf16, #tpu.memory_space<vmem>>, vector<1x4x384xbf16>
    %65 = vector.shape_cast %64 : vector<1x4x384xbf16> to vector<4x384xbf16>
    %66 = vector.extract_strided_slice %0 {offsets = [0, 32], sizes = [16, 4], strides = [1, 1]} : vector<16x36xbf16> to vector<16x4xbf16>
    %cst_37 = arith.constant dense<0.000000e+00> : vector<16x384xf32>
    %67 = tpu.matmul %66, %65, %cst_37 {dimension_numbers = #tpu.dot_dimension_numbers<[1], [0], [0], [1], [0, 0, 1, 1], [], []>} : vector<16x4xbf16>, vector<4x384xbf16>, vector<16x384xf32> -> vector<16x384xf32>
    %68 = arith.addf %63, %67 : vector<16x384xf32>
    %69 = vector.broadcast %2 : vector<16x1xf32> to vector<16x384xf32>
    %70 = arith.addf %68, %69 : vector<16x384xf32>
    %cst_38 = arith.constant 0.000000e+00 : f32
    %71 = vector.broadcast %cst_38 : f32 to vector<16x384xf32>
    %72 = arith.maximumf %70, %71 : vector<16x384xf32>
    %c0_39 = arith.constant 0 : index
    %c0_40 = arith.constant 0 : index
    %c0_41 = arith.constant 0 : index
    %73 = vector.load %arg6[%c0_39, %c0_40, %c0_41] : memref<1x16x1xf32, #tpu.memory_space<vmem>>, vector<1x16x1xf32>
    %74 = vector.shape_cast %73 : vector<1x16x1xf32> to vector<16x1xf32>
    %75 = vector.broadcast %74 : vector<16x1xf32> to vector<16x384xf32>
    %76 = arith.mulf %72, %75 : vector<16x384xf32>
    %cst_42 = arith.constant 0.000000e+00 : f32
    %77 = vector.shape_cast %22 : vector<1x384xi1> to vector<1x384xi1>
    %78 = vector.broadcast %77 : vector<1x384xi1> to vector<16x384xi1>
    %79 = vector.broadcast %cst_42 : f32 to vector<16x384xf32>
    %80 = arith.select %78, %76, %79 : vector<16x384xi1>, vector<16x384xf32>
    %cst_43 = arith.constant 0.000000e+00 : bf16
    %81 = vector.broadcast %cst_43 : bf16 to vector<16x25xbf16>
    %c0_44 = arith.constant 0 : index
    %c0_45 = arith.constant 0 : index
    %82 = vector.load %arg8[%c0_44, %c0_45] : memref<16x456xbf16, #tpu.memory_space<vmem>>, vector<16x25xbf16>
    tpu.vector_store %arg8[%c0_44, %c0_45], %81 {strides = array<i32>} : memref<16x456xbf16, #tpu.memory_space<vmem>>, vector<16x25xbf16>,
    %cst_46 = arith.constant 0.000000e+00 : bf16
    %83 = vector.broadcast %cst_46 : bf16 to vector<16x47xbf16>
    %c0_47 = arith.constant 0 : index
    %c409 = arith.constant 409 : index
    %84 = vector.load %arg8[%c0_47, %c409] : memref<16x456xbf16, #tpu.memory_space<vmem>>, vector<16x47xbf16>
    tpu.vector_store %arg8[%c0_47, %c409], %83 {strides = array<i32>} : memref<16x456xbf16, #tpu.memory_space<vmem>>, vector<16x47xbf16>,
    %85 = arith.truncf %80 : vector<16x384xf32> to vector<16x384xbf16>
    %c0_48 = arith.constant 0 : index
    %c25_49 = arith.constant 25 : index
    %86 = vector.load %arg8[%c0_48, %c25_49] : memref<16x456xbf16, #tpu.memory_space<vmem>>, vector<16x384xbf16>
    tpu.vector_store %arg8[%c0_48, %c25_49], %85 {strides = array<i32>} : memref<16x456xbf16, #tpu.memory_space<vmem>>, vector<16x384xbf16>,
    %cst_50 = arith.constant 0.000000e+00 : f32
    %87 = vector.broadcast %cst_50 : f32 to vector<32x384xf32>
    %c0_51 = arith.constant 0 : index
    %c0_52 = arith.constant 0 : index
    %88 = vector.load %arg8[%c0_51, %c0_52] : memref<16x456xbf16, #tpu.memory_space<vmem>>, vector<16x384xbf16>
    %89 = vector.extract_strided_slice %1 {offsets = [0, 0], sizes = [32, 16], strides = [1, 1]} : vector<32x144xbf16> to vector<32x16xbf16>
    %cst_53 = arith.constant dense<0.000000e+00> : vector<32x384xf32>
    %90 = tpu.matmul %89, %88, %cst_53 {dimension_numbers = #tpu.dot_dimension_numbers<[1], [0], [0], [1], [0, 0, 1, 1], [], []>} : vector<32x16xbf16>, vector<16x384xbf16>, vector<32x384xf32> -> vector<32x384xf32>
    %91 = arith.addf %87, %90 : vector<32x384xf32>
    %c0_54 = arith.constant 0 : index
    %c1_55 = arith.constant 1 : index
    %92 = vector.load %arg8[%c0_54, %c1_55] : memref<16x456xbf16, #tpu.memory_space<vmem>>, vector<16x384xbf16>
    %93 = vector.extract_strided_slice %1 {offsets = [0, 16], sizes = [32, 16], strides = [1, 1]} : vector<32x144xbf16> to vector<32x16xbf16>
    %cst_56 = arith.constant dense<0.000000e+00> : vector<32x384xf32>
    %94 = tpu.matmul %93, %92, %cst_56 {dimension_numbers = #tpu.dot_dimension_numbers<[1], [0], [0], [1], [0, 0, 1, 1], [], []>} : vector<32x16xbf16>, vector<16x384xbf16>, vector<32x384xf32> -> vector<32x384xf32>
    %95 = arith.addf %91, %94 : vector<32x384xf32>
    %c0_57 = arith.constant 0 : index
    %c2_58 = arith.constant 2 : index
    %96 = vector.load %arg8[%c0_57, %c2_58] : memref<16x456xbf16, #tpu.memory_space<vmem>>, vector<16x384xbf16>
    %97 = vector.extract_strided_slice %1 {offsets = [0, 32], sizes = [32, 16], strides = [1, 1]} : vector<32x144xbf16> to vector<32x16xbf16>
    %cst_59 = arith.constant dense<0.000000e+00> : vector<32x384xf32>
    %98 = tpu.matmul %97, %96, %cst_59 {dimension_numbers = #tpu.dot_dimension_numbers<[1], [0], [0], [1], [0, 0, 1, 1], [], []>} : vector<32x16xbf16>, vector<16x384xbf16>, vector<32x384xf32> -> vector<32x384xf32>
    %99 = arith.addf %95, %98 : vector<32x384xf32>
    %c0_60 = arith.constant 0 : index
    %c24_61 = arith.constant 24 : index
    %100 = vector.load %arg8[%c0_60, %c24_61] : memref<16x456xbf16, #tpu.memory_space<vmem>>, vector<16x384xbf16>
    %101 = vector.extract_strided_slice %1 {offsets = [0, 48], sizes = [32, 16], strides = [1, 1]} : vector<32x144xbf16> to vector<32x16xbf16>
    %cst_62 = arith.constant dense<0.000000e+00> : vector<32x384xf32>
    %102 = tpu.matmul %101, %100, %cst_62 {dimension_numbers = #tpu.dot_dimension_numbers<[1], [0], [0], [1], [0, 0, 1, 1], [], []>} : vector<32x16xbf16>, vector<16x384xbf16>, vector<32x384xf32> -> vector<32x384xf32>
    %103 = arith.addf %99, %102 : vector<32x384xf32>
    %c0_63 = arith.constant 0 : index
    %c25_64 = arith.constant 25 : index
    %104 = vector.load %arg8[%c0_63, %c25_64] : memref<16x456xbf16, #tpu.memory_space<vmem>>, vector<16x384xbf16>
    %105 = vector.extract_strided_slice %1 {offsets = [0, 64], sizes = [32, 16], strides = [1, 1]} : vector<32x144xbf16> to vector<32x16xbf16>
    %cst_65 = arith.constant dense<0.000000e+00> : vector<32x384xf32>
    %106 = tpu.matmul %105, %104, %cst_65 {dimension_numbers = #tpu.dot_dimension_numbers<[1], [0], [0], [1], [0, 0, 1, 1], [], []>} : vector<32x16xbf16>, vector<16x384xbf16>, vector<32x384xf32> -> vector<32x384xf32>
    %107 = arith.addf %103, %106 : vector<32x384xf32>
    %c0_66 = arith.constant 0 : index
    %c26_67 = arith.constant 26 : index
    %108 = vector.load %arg8[%c0_66, %c26_67] : memref<16x456xbf16, #tpu.memory_space<vmem>>, vector<16x384xbf16>
    %109 = vector.extract_strided_slice %1 {offsets = [0, 80], sizes = [32, 16], strides = [1, 1]} : vector<32x144xbf16> to vector<32x16xbf16>
    %cst_68 = arith.constant dense<0.000000e+00> : vector<32x384xf32>
    %110 = tpu.matmul %109, %108, %cst_68 {dimension_numbers = #tpu.dot_dimension_numbers<[1], [0], [0], [1], [0, 0, 1, 1], [], []>} : vector<32x16xbf16>, vector<16x384xbf16>, vector<32x384xf32> -> vector<32x384xf32>
    %111 = arith.addf %107, %110 : vector<32x384xf32>
    %c0_69 = arith.constant 0 : index
    %c48_70 = arith.constant 48 : index
    %112 = vector.load %arg8[%c0_69, %c48_70] : memref<16x456xbf16, #tpu.memory_space<vmem>>, vector<16x384xbf16>
    %113 = vector.extract_strided_slice %1 {offsets = [0, 96], sizes = [32, 16], strides = [1, 1]} : vector<32x144xbf16> to vector<32x16xbf16>
    %cst_71 = arith.constant dense<0.000000e+00> : vector<32x384xf32>
    %114 = tpu.matmul %113, %112, %cst_71 {dimension_numbers = #tpu.dot_dimension_numbers<[1], [0], [0], [1], [0, 0, 1, 1], [], []>} : vector<32x16xbf16>, vector<16x384xbf16>, vector<32x384xf32> -> vector<32x384xf32>
    %115 = arith.addf %111, %114 : vector<32x384xf32>
    %c0_72 = arith.constant 0 : index
    %c49_73 = arith.constant 49 : index
    %116 = vector.load %arg8[%c0_72, %c49_73] : memref<16x456xbf16, #tpu.memory_space<vmem>>, vector<16x384xbf16>
    %117 = vector.extract_strided_slice %1 {offsets = [0, 112], sizes = [32, 16], strides = [1, 1]} : vector<32x144xbf16> to vector<32x16xbf16>
    %cst_74 = arith.constant dense<0.000000e+00> : vector<32x384xf32>
    %118 = tpu.matmul %117, %116, %cst_74 {dimension_numbers = #tpu.dot_dimension_numbers<[1], [0], [0], [1], [0, 0, 1, 1], [], []>} : vector<32x16xbf16>, vector<16x384xbf16>, vector<32x384xf32> -> vector<32x384xf32>
    %119 = arith.addf %115, %118 : vector<32x384xf32>
    %c0_75 = arith.constant 0 : index
    %c50_76 = arith.constant 50 : index
    %120 = vector.load %arg8[%c0_75, %c50_76] : memref<16x456xbf16, #tpu.memory_space<vmem>>, vector<16x384xbf16>
    %121 = vector.extract_strided_slice %1 {offsets = [0, 128], sizes = [32, 16], strides = [1, 1]} : vector<32x144xbf16> to vector<32x16xbf16>
    %cst_77 = arith.constant dense<0.000000e+00> : vector<32x384xf32>
    %122 = tpu.matmul %121, %120, %cst_77 {dimension_numbers = #tpu.dot_dimension_numbers<[1], [0], [0], [1], [0, 0, 1, 1], [], []>} : vector<32x16xbf16>, vector<16x384xbf16>, vector<32x384xf32> -> vector<32x384xf32>
    %123 = arith.addf %119, %122 : vector<32x384xf32>
    %124 = vector.broadcast %3 : vector<32x1xf32> to vector<32x384xf32>
    %125 = arith.addf %123, %124 : vector<32x384xf32>
    %c0_78 = arith.constant 0 : index
    %c0_79 = arith.constant 0 : index
    %c0_80 = arith.constant 0 : index
    %126 = vector.load %arg7[%c0_78, %c0_79, %c0_80] : memref<1x32x384xf32, #tpu.memory_space<vmem>>, vector<1x32x384xf32>
    %127 = vector.shape_cast %126 : vector<1x32x384xf32> to vector<32x384xf32>
    %128 = vector.shape_cast %125 : vector<32x384xf32> to vector<1x32x384xf32>
    tpu.vector_store %arg7[%c0_78, %c0_79, %c0_80], %128 {strides = array<i32>} : memref<1x32x384xf32, #tpu.memory_space<vmem>>, vector<1x32x384xf32>,
    return
  }
  func.func @transform_0(%arg0: i32) -> (i32, i32, i32) {
    %c0_i32 = arith.constant 0 : i32
    %c0_i32_0 = arith.constant 0 : i32
    %c0_i32_1 = arith.constant 0 : i32
    return %arg0, %c0_i32, %c0_i32_0 : i32, i32, i32
  }
  func.func @transform_1(%arg0: i32) -> (i32, i32) {
    %c0_i32 = arith.constant 0 : i32
    %c0_i32_0 = arith.constant 0 : i32
    %c0_i32_1 = arith.constant 0 : i32
    return %c0_i32, %c0_i32_0 : i32, i32
  }
  func.func @transform_2(%arg0: i32) -> (i32, i32) {
    %c0_i32 = arith.constant 0 : i32
    %c0_i32_0 = arith.constant 0 : i32
    %c0_i32_1 = arith.constant 0 : i32
    return %c0_i32, %c0_i32_0 : i32, i32
  }
  func.func @transform_3(%arg0: i32) -> (i32, i32) {
    %c0_i32 = arith.constant 0 : i32
    %c0_i32_0 = arith.constant 0 : i32
    %c0_i32_1 = arith.constant 0 : i32
    return %c0_i32, %c0_i32_0 : i32, i32
  }
  func.func @transform_4(%arg0: i32) -> (i32, i32) {
    %c0_i32 = arith.constant 0 : i32
    %c0_i32_0 = arith.constant 0 : i32
    %c0_i32_1 = arith.constant 0 : i32
    return %c0_i32, %c0_i32_0 : i32, i32
  }
  func.func @transform_5(%arg0: i32) -> (i32, i32, i32) {
    %c0_i32 = arith.constant 0 : i32
    %c0_i32_0 = arith.constant 0 : i32
    %c0_i32_1 = arith.constant 0 : i32
    return %arg0, %c0_i32, %c0_i32_0 : i32, i32, i32
  }
  func.func @transform_6(%arg0: i32) -> (i32, i32, i32) {
    %c0_i32 = arith.constant 0 : i32
    %c0_i32_0 = arith.constant 0 : i32
    %c0_i32_1 = arith.constant 0 : i32
    return %arg0, %c0_i32, %c0_i32_0 : i32, i32, i32
  }
}

</mosaic_0001>

<llo_original>
// kernel: tpu_custom_call.1
$region0: #{tpu_custom_call.1}
  #allocation0 [shape = 'u32[]', space=smem, size = 0x4, offset = 0x4, fixed_abs, tag = 'smem constant byte address 0x4 - core index']
  #allocation1 [shape = 'u32[72,128]{1,0:T(1,128)}', space=vmem, size = 0x9000, scoped, tag = 'internal scratch']
  #allocation2 [shape = 'bf16[16,456]{1,0:T(8,128)(2,1)}', space=vmem, size = 0x4000, scoped, tag = 'scratch operand']
  %s0 = inlined_call_operand.vmem [shape: bf16[2,4,456], index: 0, kind: input, shape index: {}]
  %s1 = inlined_call_operand.vmem [shape: bf16[16,36], index: 1, kind: input, shape index: {}]
  %s2 = inlined_call_operand.vmem [shape: f32[16,1], index: 2, kind: input, shape index: {}]
  %s3 = inlined_call_operand.vmem [shape: bf16[32,144], index: 3, kind: input, shape index: {}]
  %s4 = inlined_call_operand.vmem [shape: f32[32,1], index: 4, kind: input, shape index: {}]
  %s5 = inlined_call_operand.vmem [shape: f32[2,16,1], index: 5, kind: input, shape index: {}]
  %s6 = inlined_call_operand.hbm [shape: f32[2,32,384], index: 6, kind: output, shape index: {}]
  %s7 = sld [smem:[#allocation0]]
  $region57: #{tpu_custom_call.1} parent=0
    _
  %s9 = ssub.s32 1, %s7
  %s10 = scalar_select 0, %s9, %s7
  $region1: #{tpu_custom_call.1} parent=0
    #allocation3 [shape = 'u8[98304]{0}', space=vmem, size = 0x18000, scoped, tag = 'output window, operand 0']
    #allocation4 [shape = 's32[2]{0}', space=sflag, size = 0x8, scoped, tag = 'scoped memory for tpu_custom_call.1']
    %11 = vsyncpa [#allocation4], 0
    %s12 = scalar_lea.sflag [#allocation4], 1
    %13 = vsyncpa %s12, 0
    loop: start=0, step=1, limit=4
    $region2: #{tpu_custom_call.1} parent=1 // loop_pre_header
      _
    $region3: #{tpu_custom_call.1} parent=1 // loop_header
      %s15 = sphi 0, %s19
      %p16 = scmp.ge.s32.totalorder %s15, 4
      %s25 = sphi 0, %s27
      %s28 = sphi 0, %s25
      %s29 = sphi 0, %s28
      %s45 = sphi 0, %s29
      %s49 = sphi 0, %s49
      %s51 = sphi 0, %s49
      %s52 = sphi 0, %s51
      %s66 = sphi 0, %s52
      %s70 = sphi 0, %s70
      %s72 = sphi 0, %s70
      %s73 = sphi 0, %s72
      %s87 = sphi 0, %s73
      %s91 = sphi 0, %s91
      %s93 = sphi 0, %s91
      %s94 = sphi 0, %s93
      %s108 = sphi 0, %s94
      %s112 = sphi 0, %s112
      %s114 = sphi 0, %s112
      %s115 = sphi 0, %s114
      %s129 = sphi 0, %s115
      %s135 = sphi 0, %s137
      %s138 = sphi 0, %s135
      %s139 = sphi 0, %s138
      %s155 = sphi 0, %s139
      %s161 = sphi 0, %s163
      %s164 = sphi 0, %s161
      %s165 = sphi 0, %s164
      %s181 = sphi 0, %s165
    $region4: #{tpu_custom_call.1} parent=1 // loop_header_branch
      %18 = sbr.rel (%p16) target = $region8
    $region5: #{tpu_custom_call.1} parent=1 // loop_body
      %s20 = ssub.s32 %s15, 1
      %s21 = ssub.s32 %s15, 2
      %s22 = sadd.s32 %s15, 1
      %s23 = ssub.s32 %s15, %s22
      %p24 = scmp.eq.s32.totalorder %s23, 0
      %s26 = sadd.s32 %s25, 1
      %s27 = scalar_select %p24, %s25, %s26
      %p30 = pneg %p24
      %p31 = scmp.eq.s32.totalorder %s15, 1
      %p32 = por %p30, %p31
      %p33 = scmp.ne.s32.totalorder %s25, %s28
      %p34 = scmp.eq.s32.totalorder %s15, 0
      %p35 = por %p33, %p34
      %p36 = scmp.ne.s32.totalorder %s25, %s28
      %p37 = scmp.eq.s32.totalorder %s20, 1
      %p38 = por %p36, %p37
      %p39 = scmp.ne.s32.totalorder %s28, %s29
      %p40 = scmp.eq.s32.totalorder %s20, 0
      %p41 = por %p39, %p40
      %p42 = scmp.ne.s32.totalorder %s28, %s29
      %p43 = scmp.eq.s32.totalorder %s21, 1
      %p44 = por %p42, %p43
      %p46 = scmp.ne.s32.totalorder %s29, %s45
      %p47 = scmp.eq.s32.totalorder %s21, 0
      %p48 = por %p46, %p47
      %s50 = sadd.s32 %s49, 1
      %p53 = scmp.eq.s32.totalorder %s15, 1
      %p54 = scmp.ne.s32.totalorder %s49, %s51
      %p55 = scmp.eq.s32.totalorder %s15, 0
      %p56 = por %p54, %p55
      %p57 = scmp.ne.s32.totalorder %s49, %s51
      %p58 = scmp.eq.s32.totalorder %s20, 1
      %p59 = por %p57, %p58
      %p60 = scmp.ne.s32.totalorder %s51, %s52
      %p61 = scmp.eq.s32.totalorder %s20, 0
      %p62 = por %p60, %p61
      %p63 = scmp.ne.s32.totalorder %s51, %s52
      %p64 = scmp.eq.s32.totalorder %s21, 1
      %p65 = por %p63, %p64
      %p67 = scmp.ne.s32.totalorder %s52, %s66
      %p68 = scmp.eq.s32.totalorder %s21, 0
      %p69 = por %p67, %p68
      %s71 = sadd.s32 %s70, 1
      %p74 = scmp.eq.s32.totalorder %s15, 1
      %p75 = scmp.ne.s32.totalorder %s70, %s72
      %p76 = scmp.eq.s32.totalorder %s15, 0
      %p77 = por %p75, %p76
      %p78 = scmp.ne.s32.totalorder %s70, %s72
      %p79 = scmp.eq.s32.totalorder %s20, 1
      %p80 = por %p78, %p79
      %p81 = scmp.ne.s32.totalorder %s72, %s73
      %p82 = scmp.eq.s32.totalorder %s20, 0
      %p83 = por %p81, %p82
      %p84 = scmp.ne.s32.totalorder %s72, %s73
      %p85 = scmp.eq.s32.totalorder %s21, 1
      %p86 = por %p84, %p85
      %p88 = scmp.ne.s32.totalorder %s73, %s87
      %p89 = scmp.eq.s32.totalorder %s21, 0
      %p90 = por %p88, %p89
      %s92 = sadd.s32 %s91, 1
      %p95 = scmp.eq.s32.totalorder %s15, 1
      %p96 = scmp.ne.s32.totalorder %s91, %s93
      %p97 = scmp.eq.s32.totalorder %s15, 0
      %p98 = por %p96, %p97
      %p99 = scmp.ne.s32.totalorder %s91, %s93
      %p100 = scmp.eq.s32.totalorder %s20, 1
      %p101 = por %p99, %p100
      %p102 = scmp.ne.s32.totalorder %s93, %s94
      %p103 = scmp.eq.s32.totalorder %s20, 0
      %p104 = por %p102, %p103
      %p105 = scmp.ne.s32.totalorder %s93, %s94
      %p106 = scmp.eq.s32.totalorder %s21, 1
      %p107 = por %p105, %p106
      %p109 = scmp.ne.s32.totalorder %s94, %s108
      %p110 = scmp.eq.s32.totalorder %s21, 0
      %p111 = por %p109, %p110
      %s113 = sadd.s32 %s112, 1
      %p116 = scmp.eq.s32.totalorder %s15, 1
      %p117 = scmp.ne.s32.totalorder %s112, %s114
      %p118 = scmp.eq.s32.totalorder %s15, 0
      %p119 = por %p117, %p118
      %p120 = scmp.ne.s32.totalorder %s112, %s114
      %p121 = scmp.eq.s32.totalorder %s20, 1
      %p122 = por %p120, %p121
      %p123 = scmp.ne.s32.totalorder %s114, %s115
      %p124 = scmp.eq.s32.totalorder %s20, 0
      %p125 = por %p123, %p124
      %p126 = scmp.ne.s32.totalorder %s114, %s115
      %p127 = scmp.eq.s32.totalorder %s21, 1
      %p128 = por %p126, %p127
      %p130 = scmp.ne.s32.totalorder %s115, %s129
      %p131 = scmp.eq.s32.totalorder %s21, 0
      %p132 = por %p130, %p131
      %s133 = ssub.s32 %s15, %s22
      %p134 = scmp.eq.s32.totalorder %s133, 0
      %s136 = sadd.s32 %s135, 1
      %s137 = scalar_select %p134, %s135, %s136
      %p140 = pneg %p134
      %p141 = scmp.eq.s32.totalorder %s15, 1
      %p142 = por %p140, %p141
      %p143 = scmp.ne.s32.totalorder %s135, %s138
      %p144 = scmp.eq.s32.totalorder %s15, 0
      %p145 = por %p143, %p144
      %p146 = scmp.ne.s32.totalorder %s135, %s138
      %p147 = scmp.eq.s32.totalorder %s20, 1
      %p148 = por %p146, %p147
      %p149 = scmp.ne.s32.totalorder %s138, %s139
      %p150 = scmp.eq.s32.totalorder %s20, 0
      %p151 = por %p149, %p150
      %p152 = scmp.ne.s32.totalorder %s138, %s139
      %p153 = scmp.eq.s32.totalorder %s21, 1
      %p154 = por %p152, %p153
      %p156 = scmp.ne.s32.totalorder %s139, %s155
      %p157 = scmp.eq.s32.totalorder %s21, 0
      %p158 = por %p156, %p157
      %s159 = ssub.s32 %s15, %s22
      %p160 = scmp.eq.s32.totalorder %s159, 0
      %s162 = sadd.s32 %s161, 1
      %s163 = scalar_select %p160, %s161, %s162
      %p166 = pneg %p160
      %p167 = scmp.eq.s32.totalorder %s15, 1
      %p168 = por %p166, %p167
      %p169 = scmp.ne.s32.totalorder %s161, %s164
      %p170 = scmp.eq.s32.totalorder %s15, 0
      %p171 = por %p169, %p170
      %p172 = scmp.ne.s32.totalorder %s161, %s164
      %p173 = scmp.eq.s32.totalorder %s20, 1
      %p174 = por %p172, %p173
      %p175 = scmp.ne.s32.totalorder %s164, %s165
      %p176 = scmp.eq.s32.totalorder %s20, 0
      %p177 = por %p175, %p176
      %p178 = scmp.ne.s32.totalorder %s164, %s165
      %p179 = scmp.eq.s32.totalorder %s21, 1
      %p180 = por %p178, %p179
      %p182 = scmp.ne.s32.totalorder %s165, %s181
      %p183 = scmp.eq.s32.totalorder %s21, 0
      %p184 = por %p182, %p183
      %p185 = scmp.le.s32.totalorder 1, %s15
      %p186 = scmp.lt.s32.totalorder %s15, 3
      %p187 = pnand %p185, %p186
      %p188 = pneg %p187
      // Predicated region
      $region9: #{tpu_custom_call.1} parent=5 // pred_check
        _
      $region10: #{tpu_custom_call.1} parent=5 // pred_check_branch
        %190 = sbr.rel (%p187) target = $region12
      $region11: #{tpu_custom_call.1} parent=5 // pred_region
        %s191 = ssub.s32 %s15, 1
        // Predicated region
        $region13: #{tpu_custom_call.1} parent=11 // pred_check
          %p192 = pneg %p62
        $region14: #{tpu_custom_call.1} parent=11 // pred_check_branch
          %194 = sbr.rel (%p192) target = $region16
        $region15: #{tpu_custom_call.1} parent=11 // pred_region
          _
        $region16: #{tpu_custom_call.1} parent=11 // pred_fallthru
          _
        // Predicated region
        $region17: #{tpu_custom_call.1} parent=11 // pred_check
          %p195 = pneg %p83
        $region18: #{tpu_custom_call.1} parent=11 // pred_check_branch
          %197 = sbr.rel (%p195) target = $region20
        $region19: #{tpu_custom_call.1} parent=11 // pred_region
          _
        $region20: #{tpu_custom_call.1} parent=11 // pred_fallthru
          _
        // Predicated region
        $region21: #{tpu_custom_call.1} parent=11 // pred_check
          %p198 = pneg %p104
        $region22: #{tpu_custom_call.1} parent=11 // pred_check_branch
          %200 = sbr.rel (%p198) target = $region24
        $region23: #{tpu_custom_call.1} parent=11 // pred_region
          _
        $region24: #{tpu_custom_call.1} parent=11 // pred_fallthru
          _
        // Predicated region
        $region25: #{tpu_custom_call.1} parent=11 // pred_check
          %p201 = pneg %p125
        $region26: #{tpu_custom_call.1} parent=11 // pred_check_branch
          %203 = sbr.rel (%p201) target = $region28
        $region27: #{tpu_custom_call.1} parent=11 // pred_region
          _
        $region28: #{tpu_custom_call.1} parent=11 // pred_fallthru
          _
      $region12: #{tpu_custom_call.1} parent=5 // pred_fallthru
        _
      %p204 = scmp.lt.s32.totalorder %s15, 2
      // Predicated region
      $region29: #{tpu_custom_call.1} parent=5 // pred_check
        %p205 = pneg %p204
      $region30: #{tpu_custom_call.1} parent=5 // pred_check_branch
        %207 = sbr.rel (%p205) target = $region32
      $region31: #{tpu_custom_call.1} parent=5 // pred_region
        // Predicated region
        $region33: #{tpu_custom_call.1} parent=31 // pred_check
          %p208 = pneg %p35
        $region34: #{tpu_custom_call.1} parent=31 // pred_check_branch
          %210 = sbr.rel (%p208) target = $region36
        $region35: #{tpu_custom_call.1} parent=31 // pred_region
          %p211 = scmp.lt.s32.totalorder %s15, 1
          %s212 = scalar_select %p211, %s15, 1
          %s213 = smul.addr %s212, 4
          %s214 = smul.addr %s213, 2
          %s215 = scalar_lea.vmem %s0, %s214
        $region36: #{tpu_custom_call.1} parent=31 // pred_fallthru
          _
        // Predicated region
        $region37: #{tpu_custom_call.1} parent=31 // pred_check
          %p216 = pneg %p145
        $region38: #{tpu_custom_call.1} parent=31 // pred_check_branch
          %218 = sbr.rel (%p216) target = $region40
        $region39: #{tpu_custom_call.1} parent=31 // pred_region
          %p219 = scmp.lt.s32.totalorder %s15, 1
          %s220 = scalar_select %p219, %s15, 1
          %s221 = smul.addr %s220, 2
          %s222 = smul.addr %s221, 8
          %s223 = scalar_lea.vmem %s5, %s222
        $region40: #{tpu_custom_call.1} parent=31 // pred_fallthru
          _
      $region32: #{tpu_custom_call.1} parent=5 // pred_fallthru
        _
      %p224 = scmp.le.s32.totalorder 1, %s15
      %p225 = scmp.lt.s32.totalorder %s15, 3
      %p226 = pnand %p224, %p225
      %p227 = pneg %p226
      // Predicated region
      $region41: #{tpu_custom_call.1} parent=5 // pred_check
        _
      $region42: #{tpu_custom_call.1} parent=5 // pred_check_branch
        %229 = sbr.rel (%p226) target = $region44
      $region43: #{tpu_custom_call.1} parent=5 // pred_region
        %s230 = ssub.s32 %s15, 1
        %p231 = scmp.lt.s32.totalorder %s20, 1
        %s232 = scalar_select %p231, %s20, 1
        %s233 = smul.addr %s232, 4
        %s234 = smul.addr %s233, 2
        %s235 = scalar_lea.vmem %s0, %s234
        %p236 = pneg %p41
        %p237 = pneg %p38
        %p238 = pneg %p62
        %p239 = pneg %p59
        %p240 = pneg %p83
        %p241 = pneg %p80
        %p242 = pneg %p104
        %p243 = pneg %p101
        %p244 = pneg %p125
        %p245 = pneg %p122
        %p246 = scmp.lt.s32.totalorder %s20, 1
        %s247 = scalar_select %p246, %s20, 1
        %s248 = smul.addr %s247, 2
        %s249 = smul.addr %s248, 8
        %s250 = scalar_lea.vmem %s5, %s249
        %p251 = pneg %p151
        %p252 = pneg %p148
        %p253 = pneg %p177
        %p254 = pneg %p174
        %s255 = sand.u32 %s164, 1
        %s256 = scalar_lea.sflag [#allocation4], %s255
        %s257 = sand.u32 %s164, 1
        %s258 = smul.addr %s257, 96
        %s259 = scalar_lea.vmem [#allocation3], %s258
        %p260 = scmp.lt.s32.totalorder %s20, 1
        %s261 = scalar_select %p260, %s20, 1
        %s262 = smul.addr %s261, 4
        %s263 = smul.addr %s262, 2
        %s264 = scalar_lea.vmem %s0, %s263
        %p265 = scmp.lt.s32.totalorder %s20, 1
        %s266 = scalar_select %p265, %s20, 1
        %s267 = smul.addr %s266, 2
        %s268 = smul.addr %s267, 8
        %s269 = scalar_lea.vmem %s5, %s268
        %v271 = vld [vmem:[%s1] sm:$0xf]
        %v272 = vld [vmem:[%s1 + $0x4] sm:$0xf]
        %v273 = vld [vmem:[%s3] sm:$0xff]
        %v274 = vld [vmem:[%s3 + $0x8] sm:$0xff]
        %v275 = vld [vmem:[%s3 + $0x10] sm:$0xff]
        %v276 = vld [vmem:[%s3 + $0x18] sm:$0xff]
        %v277 = vld [vmem:[%s2] sm:$0xff]
        %v278 = vld [vmem:[%s2 + $0x8] sm:$0xff]
        %v279 = vld [vmem:[%s4] sm:$0xff]
        %v280 = vld [vmem:[%s4 + $0x8] sm:$0xff]
        %v281 = vld [vmem:[%s4 + $0x10] sm:$0xff]
        %v282 = vld [vmem:[%s4 + $0x18] sm:$0xff]
        %v283 = vlaneseq
        %v284 = vand.u32 %v283, 127
        %v285 = vadd.s32 %v284, 128
        %v286 = vadd.s32 %v284, 256
        %vm287 = vcmp.lt.s32.totalorder %v284, 0
        %v288 = vsub.s32 0, %v284
        %v289 = vsel %vm287, %v288, %v284
        %v290 = vand.u32 %v289, 65535
        %v291 = vshrl.u32 %v289, 16
        %v293 = vmul.u32 %v290, 43691
        %v294 = vmul.u32 %v290, 43690
        %v295 = vmul.u32 %v291, 43691
        %v296 = vmul.u32 %v291, 43690
        %v297 = vshll.u32 %v294, 16
        %v298 = vshrl.u32 %v294, 16
        %v299 = vshll.u32 %v295, 16
        %v300 = vshrl.u32 %v295, 16
        %vm301 = vc.u32 %v293, %v297
        %v302 = vsel %vm301, 1, 0
        %v303 = vadd.s32 %v293, %v297
        %v304 = vadd.s32 %v296, %v302
        %vm305 = vc.u32 %v303, %v299
        %v306 = vsel %vm305, 1, 0
        %v307 = vadd.s32 %v303, %v299
        %v308 = vadd.s32 %v304, %v306
        %v309 = vadd.s32 %v308, %v298
        %v310 = vadd.s32 %v309, %v300
        %v311 = vshrl.u32 %v310, 4
        %v312 = vmul.u32 %v311, 24
        %v313 = vsub.s32 %v289, %v312
        %v314 = vsub.s32 0, %v313
        %v315 = vsel %vm287, %v314, %v313
        %vm316 = vcmp.lt.s32.totalorder %v285, 0
        %v317 = vsub.s32 0, %v285
        %v318 = vsel %vm316, %v317, %v285
        %v319 = vand.u32 %v318, 65535
        %v320 = vshrl.u32 %v318, 16
        %v322 = vmul.u32 %v319, 43691
        %v323 = vmul.u32 %v319, 43690
        %v324 = vmul.u32 %v320, 43691
        %v325 = vmul.u32 %v320, 43690
        %v326 = vshll.u32 %v323, 16
        %v327 = vshrl.u32 %v323, 16
        %v328 = vshll.u32 %v324, 16
        %v329 = vshrl.u32 %v324, 16
        %vm330 = vc.u32 %v322, %v326
        %v331 = vsel %vm330, 1, 0
        %v332 = vadd.s32 %v322, %v326
        %v333 = vadd.s32 %v325, %v331
        %vm334 = vc.u32 %v332, %v328
        %v335 = vsel %vm334, 1, 0
        %v336 = vadd.s32 %v332, %v328
        %v337 = vadd.s32 %v333, %v335
        %v338 = vadd.s32 %v337, %v327
        %v339 = vadd.s32 %v338, %v329
        %v340 = vshrl.u32 %v339, 4
        %v341 = vmul.u32 %v340, 24
        %v342 = vsub.s32 %v318, %v341
        %v343 = vsub.s32 0, %v342
        %v344 = vsel %vm316, %v343, %v342
        %vm345 = vcmp.lt.s32.totalorder %v286, 0
        %v346 = vsub.s32 0, %v286
        %v347 = vsel %vm345, %v346, %v286
        %v348 = vand.u32 %v347, 65535
        %v349 = vshrl.u32 %v347, 16
        %v351 = vmul.u32 %v348, 43691
        %v352 = vmul.u32 %v348, 43690
        %v353 = vmul.u32 %v349, 43691
        %v354 = vmul.u32 %v349, 43690
        %v355 = vshll.u32 %v352, 16
        %v356 = vshrl.u32 %v352, 16
        %v357 = vshll.u32 %v353, 16
        %v358 = vshrl.u32 %v353, 16
        %vm359 = vc.u32 %v351, %v355
        %v360 = vsel %vm359, 1, 0
        %v361 = vadd.s32 %v351, %v355
        %v362 = vadd.s32 %v354, %v360
        %vm363 = vc.u32 %v361, %v357
        %v364 = vsel %vm363, 1, 0
        %v365 = vadd.s32 %v361, %v357
        %v366 = vadd.s32 %v362, %v364
        %v367 = vadd.s32 %v366, %v356
        %v368 = vadd.s32 %v367, %v358
        %v369 = vshrl.u32 %v368, 4
        %v370 = vmul.u32 %v369, 24
        %v371 = vsub.s32 %v347, %v370
        %v372 = vsub.s32 0, %v371
        %v373 = vsel %vm345, %v372, %v371
        %vm374 = vcmp.ne.s32.totalorder %v315, 0
        %vm375 = vcmp.ne.s32.totalorder %v344, 0
        %vm376 = vcmp.ne.s32.totalorder %v373, 0
        %vm377 = vcmp.lt.s32.totalorder %v315, 0
        %vm378 = vcmp.lt.s32.totalorder %v344, 0
        %vm379 = vcmp.lt.s32.totalorder %v373, 0
        %vm380 = vmand %vm377, %vm374
        %vm381 = vmand %vm378, %vm375
        %vm382 = vmand %vm379, %vm376
        %v383 = vadd.s32 %v315, 24
        %v384 = vadd.s32 %v344, 24
        %v385 = vadd.s32 %v373, 24
        %v386 = vsel %vm380, %v383, %v315
        %v387 = vsel %vm381, %v384, %v344
        %v388 = vsel %vm382, %v385, %v373
        %vm389 = vcmp.lt.s32.totalorder %v386, 16
        %vm390 = vcmp.lt.s32.totalorder %v387, 16
        %vm391 = vcmp.lt.s32.totalorder %v388, 16
        %v392 = vld [vmem:[%s264] sm:$0x3f]
        %v393 = vld [vmem:[%s264] sm:$0xff]
        %v396 = vunpack.c.l.b16 %v271
        %v397 = vunpack.c.l.b16 %v272
        %v398 = vpack.c.b16 %v397, %v396
        %399 = vrot.lane.b32.xlu0 %v398, 124
        %v400 = vpop.permute.xlu0 %399
        %402 = vst [vmem:[#allocation1] ss:$4 sm:$0xff] %v393
        %v403 = vld.sshfl [vmem:[#allocation1] sm:$0xff pattern:$0x73625140]
        %v405 = vld.sshfl [vmem:[#allocation1 + $0x8] sm:$0xff pattern:$0x73625140]
        %v407 = vld.sshfl [vmem:[#allocation1 + $0x10] sm:$0xff pattern:$0x73625140]
        %v409 = vld.sshfl [vmem:[#allocation1 + $0x18] sm:$0xff pattern:$0x73625140]
        %411 = vrot.lane.b32.xlu0 %v403, 127
        %v412 = vpop.permute.xlu0 %411
        %413 = vrot.lane.b32.xlu0 %v405, 127
        %v414 = vpop.permute.xlu0 %413
        %415 = vrot.lane.b32.xlu0 %v407, 127
        %v416 = vpop.permute.xlu0 %415
        %417 = vrot.lane.b32.xlu0 %v409, 127
        %v418 = vpop.permute.xlu0 %417
        %vm419 = vcmask 1039360
        %v420 = vsel %vm419, %v412, %v414
        %v421 = vsel %vm419, %v414, %v416
        %v422 = vsel %vm419, %v416, %v418
        %vm423 = vcmask 31744
        %v425 = vsel %vm423, %v400, 0
        %vm427 = vcmask 1041408
        %v429 = vsel %vm427, %v420, 0
        %v432 = vsel %vm427, %v421, 0
        %v435 = vsel %vm427, %v422, 0
        %437 = vmatpush.bf16.msra.mxu0 0
        %438 = vmatpush.bf16.msra.mxu0 0
        %439 = vmatpush.bf16.msra.mxu0 0
        %440 = vmatpush.bf16.msra.mxu0 0
        %441 = vmatpush.bf16.msra.mxu0 0
        %442 = vmatpush.bf16.msra.mxu0 0
        %443 = vmatpush.bf16.msra.mxu0 0
        %444 = vmatpush.bf16.msra.mxu0 %v429
        %445 = vmatmul.bf16.gmra.mxu0 %v425
        %v446 = vpop.f32.mrf.mxu0
        %v447 = vadd.f32 0.0, %v446
        %v448 = vpop.f32.mrf.mxu0
        %v449 = vadd.f32 0.0, %v448
        %450 = vdwg.mxu0
        %451 = vmatpush.bf16.msra.mxu0 0
        %452 = vmatpush.bf16.msra.mxu0 0
        %453 = vmatpush.bf16.msra.mxu0 0
        %454 = vmatpush.bf16.msra.mxu0 0
        %455 = vmatpush.bf16.msra.mxu0 0
        %456 = vmatpush.bf16.msra.mxu0 0
        %457 = vmatpush.bf16.msra.mxu0 0
        %458 = vmatpush.bf16.msra.mxu0 %v432
        %459 = vmatmul.bf16.gmra.mxu0 %v425
        %v460 = vpop.f32.mrf.mxu0
        %v461 = vadd.f32 0.0, %v460
        %v462 = vpop.f32.mrf.mxu0
        %v463 = vadd.f32 0.0, %v462
        %464 = vdwg.mxu0
        %465 = vmatpush.bf16.msra.mxu0 0
        %466 = vmatpush.bf16.msra.mxu0 0
        %467 = vmatpush.bf16.msra.mxu0 0
        %468 = vmatpush.bf16.msra.mxu0 0
        %469 = vmatpush.bf16.msra.mxu0 0
        %470 = vmatpush.bf16.msra.mxu0 0
        %471 = vmatpush.bf16.msra.mxu0 0
        %472 = vmatpush.bf16.msra.mxu0 %v435
        %473 = vmatmul.bf16.gmra.mxu0 %v425
        %v474 = vpop.f32.mrf.mxu0
        %v475 = vadd.f32 0.0, %v474
        %v476 = vpop.f32.mrf.mxu0
        %v477 = vadd.f32 0.0, %v476
        %478 = vdwg.mxu0
        %480 = vst [vmem:[#allocation1] ss:$4 sm:$0xff] %v392
        %v481 = vld.sshfl [vmem:[#allocation1] sm:$0xff pattern:$0x73625140]
        %v482 = vld.sshfl [vmem:[#allocation1 + $0x8] sm:$0xff pattern:$0x73625140]
        %v483 = vld.sshfl [vmem:[#allocation1 + $0x10] sm:$0xff pattern:$0x73625140]
        %v485 = vsel %vm423, %v398, 0
        %v487 = vsel %vm427, %v481, 0
        %v489 = vsel %vm427, %v482, 0
        %v491 = vsel %vm427, %v483, 0
        %493 = vmatpush.bf16.msra.mxu0 0
        %494 = vmatpush.bf16.msra.mxu0 0
        %495 = vmatpush.bf16.msra.mxu0 0
        %496 = vmatpush.bf16.msra.mxu0 0
        %497 = vmatpush.bf16.msra.mxu0 0
        %498 = vmatpush.bf16.msra.mxu0 0
        %499 = vmatpush.bf16.msra.mxu0 0
        %500 = vmatpush.bf16.msra.mxu0 %v487
        %501 = vmatmul.bf16.gmra.mxu0 %v485
        %v502 = vpop.f32.mrf.mxu0
        %v503 = vadd.f32 %v447, %v502
        %v504 = vpop.f32.mrf.mxu0
        %v505 = vadd.f32 %v449, %v504
        %506 = vdwg.mxu0
        %507 = vmatpush.bf16.msra.mxu0 0
        %508 = vmatpush.bf16.msra.mxu0 0
        %509 = vmatpush.bf16.msra.mxu0 0
        %510 = vmatpush.bf16.msra.mxu0 0
        %511 = vmatpush.bf16.msra.mxu0 0
        %512 = vmatpush.bf16.msra.mxu0 0
        %513 = vmatpush.bf16.msra.mxu0 0
        %514 = vmatpush.bf16.msra.mxu0 %v489
        %515 = vmatmul.bf16.gmra.mxu0 %v485
        %v516 = vpop.f32.mrf.mxu0
        %v517 = vadd.f32 %v461, %v516
        %v518 = vpop.f32.mrf.mxu0
        %v519 = vadd.f32 %v463, %v518
        %520 = vdwg.mxu0
        %521 = vmatpush.bf16.msra.mxu0 0
        %522 = vmatpush.bf16.msra.mxu0 0
        %523 = vmatpush.bf16.msra.mxu0 0
        %524 = vmatpush.bf16.msra.mxu0 0
        %525 = vmatpush.bf16.msra.mxu0 0
        %526 = vmatpush.bf16.msra.mxu0 0
        %527 = vmatpush.bf16.msra.mxu0 0
        %528 = vmatpush.bf16.msra.mxu0 %v491
        %529 = vmatmul.bf16.gmra.mxu0 %v485
        %v530 = vpop.f32.mrf.mxu0
        %v531 = vadd.f32 %v475, %v530
        %v532 = vpop.f32.mrf.mxu0
        %v533 = vadd.f32 %v477, %v532
        %534 = vdwg.mxu0
        %v535 = vld [vmem:[%s264] sm:$0xff]
        %536 = vrot.lane.b32.xlu0 %v398, 120
        %v537 = vpop.permute.xlu0 %536
        %539 = vst [vmem:[#allocation1] ss:$4 sm:$0xff] %v535
        %v540 = vld.sshfl [vmem:[#allocation1] sm:$0xff pattern:$0x73625140]
        %v542 = vld.sshfl [vmem:[#allocation1 + $0x8] sm:$0xff pattern:$0x73625140]
        %v544 = vld.sshfl [vmem:[#allocation1 + $0x10] sm:$0xff pattern:$0x73625140]
        %v546 = vld.sshfl [vmem:[#allocation1 + $0x18] sm:$0xff pattern:$0x73625140]
        %548 = vrot.lane.b32.xlu0 %v540, 126
        %v549 = vpop.permute.xlu0 %548
        %550 = vrot.lane.b32.xlu0 %v542, 126
        %v551 = vpop.permute.xlu0 %550
        %552 = vrot.lane.b32.xlu0 %v544, 126
        %v553 = vpop.permute.xlu0 %552
        %554 = vrot.lane.b32.xlu0 %v546, 126
        %v555 = vpop.permute.xlu0 %554
        %vm556 = vcmask 1031168
        %v557 = vsel %vm556, %v549, %v551
        %v558 = vsel %vm556, %v551, %v553
        %v559 = vsel %vm556, %v553, %v555
        %v561 = vsel %vm423, %v537, 0
        %v564 = vsel %vm427, %v557, 0
        %v567 = vsel %vm427, %v558, 0
        %v570 = vsel %vm427, %v559, 0
        %572 = vmatpush.bf16.msra.mxu0 0
        %573 = vmatpush.bf16.msra.mxu0 0
        %574 = vmatpush.bf16.msra.mxu0 0
        %575 = vmatpush.bf16.msra.mxu0 0
        %576 = vmatpush.bf16.msra.mxu0 0
        %577 = vmatpush.bf16.msra.mxu0 0
        %578 = vmatpush.bf16.msra.mxu0 0
        %579 = vmatpush.bf16.msra.mxu0 %v564
        %580 = vmatmul.bf16.gmra.mxu0 %v561
        %v581 = vpop.f32.mrf.mxu0
        %v582 = vadd.f32 0.0, %v581
        %v583 = vpop.f32.mrf.mxu0
        %v584 = vadd.f32 0.0, %v583
        %585 = vdwg.mxu0
        %586 = vmatpush.bf16.msra.mxu0 0
        %587 = vmatpush.bf16.msra.mxu0 0
        %588 = vmatpush.bf16.msra.mxu0 0
        %589 = vmatpush.bf16.msra.mxu0 0
        %590 = vmatpush.bf16.msra.mxu0 0
        %591 = vmatpush.bf16.msra.mxu0 0
        %592 = vmatpush.bf16.msra.mxu0 0
        %593 = vmatpush.bf16.msra.mxu0 %v567
        %594 = vmatmul.bf16.gmra.mxu0 %v561
        %v595 = vpop.f32.mrf.mxu0
        %v596 = vadd.f32 0.0, %v595
        %v597 = vpop.f32.mrf.mxu0
        %v598 = vadd.f32 0.0, %v597
        %599 = vdwg.mxu0
        %600 = vmatpush.bf16.msra.mxu0 0
        %601 = vmatpush.bf16.msra.mxu0 0
        %602 = vmatpush.bf16.msra.mxu0 0
        %603 = vmatpush.bf16.msra.mxu0 0
        %604 = vmatpush.bf16.msra.mxu0 0
        %605 = vmatpush.bf16.msra.mxu0 0
        %606 = vmatpush.bf16.msra.mxu0 0
        %607 = vmatpush.bf16.msra.mxu0 %v570
        %608 = vmatmul.bf16.gmra.mxu0 %v561
        %v609 = vpop.f32.mrf.mxu0
        %v610 = vadd.f32 0.0, %v609
        %v611 = vpop.f32.mrf.mxu0
        %v612 = vadd.f32 0.0, %v611
        %613 = vdwg.mxu0
        %v614 = vadd.f32 %v503, %v582
        %v615 = vadd.f32 %v517, %v596
        %v616 = vadd.f32 %v531, %v610
        %v617 = vadd.f32 %v505, %v584
        %v618 = vadd.f32 %v519, %v598
        %v619 = vadd.f32 %v533, %v612
        %v620 = vld [vmem:[%s264] sm:$0xff]
        %621 = vrot.lane.b32.xlu0 %v398, 116
        %v622 = vpop.permute.xlu0 %621
        %624 = vst [vmem:[#allocation1] ss:$4 sm:$0xff] %v620
        %v625 = vld.sshfl [vmem:[#allocation1] sm:$0xff pattern:$0x73625140]
        %v627 = vld.sshfl [vmem:[#allocation1 + $0x8] sm:$0xff pattern:$0x73625140]
        %v629 = vld.sshfl [vmem:[#allocation1 + $0x10] sm:$0xff pattern:$0x73625140]
        %v631 = vld.sshfl [vmem:[#allocation1 + $0x18] sm:$0xff pattern:$0x73625140]
        %633 = vrot.lane.b32.xlu0 %v625, 104
        %v634 = vpop.permute.xlu0 %633
        %635 = vrot.lane.b32.xlu0 %v627, 104
        %v636 = vpop.permute.xlu0 %635
        %637 = vrot.lane.b32.xlu0 %v629, 104
        %v638 = vpop.permute.xlu0 %637
        %639 = vrot.lane.b32.xlu0 %v631, 104
        %v640 = vpop.permute.xlu0 %639
        %vm641 = vcmask 850944
        %v642 = vsel %vm641, %v634, %v636
        %v643 = vsel %vm641, %v636, %v638
        %v644 = vsel %vm641, %v638, %v640
        %v646 = vsel %vm423, %v622, 0
        %v649 = vsel %vm427, %v642, 0
        %v652 = vsel %vm427, %v643, 0
        %v655 = vsel %vm427, %v644, 0
        %657 = vmatpush.bf16.msra.mxu0 0
        %658 = vmatpush.bf16.msra.mxu0 0
        %659 = vmatpush.bf16.msra.mxu0 0
        %660 = vmatpush.bf16.msra.mxu0 0
        %661 = vmatpush.bf16.msra.mxu0 0
        %662 = vmatpush.bf16.msra.mxu0 0
        %663 = vmatpush.bf16.msra.mxu0 0
        %664 = vmatpush.bf16.msra.mxu0 %v649
        %665 = vmatmul.bf16.gmra.mxu0 %v646
        %v666 = vpop.f32.mrf.mxu0
        %v667 = vadd.f32 0.0, %v666
        %v668 = vpop.f32.mrf.mxu0
        %v669 = vadd.f32 0.0, %v668
        %670 = vdwg.mxu0
        %671 = vmatpush.bf16.msra.mxu0 0
        %672 = vmatpush.bf16.msra.mxu0 0
        %673 = vmatpush.bf16.msra.mxu0 0
        %674 = vmatpush.bf16.msra.mxu0 0
        %675 = vmatpush.bf16.msra.mxu0 0
        %676 = vmatpush.bf16.msra.mxu0 0
        %677 = vmatpush.bf16.msra.mxu0 0
        %678 = vmatpush.bf16.msra.mxu0 %v652
        %679 = vmatmul.bf16.gmra.mxu0 %v646
        %v680 = vpop.f32.mrf.mxu0
        %v681 = vadd.f32 0.0, %v680
        %v682 = vpop.f32.mrf.mxu0
        %v683 = vadd.f32 0.0, %v682
        %684 = vdwg.mxu0
        %685 = vmatpush.bf16.msra.mxu0 0
        %686 = vmatpush.bf16.msra.mxu0 0
        %687 = vmatpush.bf16.msra.mxu0 0
        %688 = vmatpush.bf16.msra.mxu0 0
        %689 = vmatpush.bf16.msra.mxu0 0
        %690 = vmatpush.bf16.msra.mxu0 0
        %691 = vmatpush.bf16.msra.mxu0 0
        %692 = vmatpush.bf16.msra.mxu0 %v655
        %693 = vmatmul.bf16.gmra.mxu0 %v646
        %v694 = vpop.f32.mrf.mxu0
        %v695 = vadd.f32 0.0, %v694
        %v696 = vpop.f32.mrf.mxu0
        %v697 = vadd.f32 0.0, %v696
        %698 = vdwg.mxu0
        %v699 = vadd.f32 %v614, %v667
        %v700 = vadd.f32 %v615, %v681
        %v701 = vadd.f32 %v616, %v695
        %v702 = vadd.f32 %v617, %v669
        %v703 = vadd.f32 %v618, %v683
        %v704 = vadd.f32 %v619, %v697
        %v705 = vld [vmem:[%s264] sm:$0xff]
        %706 = vrot.lane.b32.xlu0 %v398, 112
        %v707 = vpop.permute.xlu0 %706
        %709 = vst [vmem:[#allocation1] ss:$4 sm:$0xff] %v705
        %v710 = vld.sshfl [vmem:[#allocation1] sm:$0xff pattern:$0x73625140]
        %v712 = vld.sshfl [vmem:[#allocation1 + $0x8] sm:$0xff pattern:$0x73625140]
        %v714 = vld.sshfl [vmem:[#allocation1 + $0x10] sm:$0xff pattern:$0x73625140]
        %v716 = vld.sshfl [vmem:[#allocation1 + $0x18] sm:$0xff pattern:$0x73625140]
        %718 = vrot.lane.b32.xlu0 %v710, 103
        %v719 = vpop.permute.xlu0 %718
        %720 = vrot.lane.b32.xlu0 %v712, 103
        %v721 = vpop.permute.xlu0 %720
        %722 = vrot.lane.b32.xlu0 %v714, 103
        %v723 = vpop.permute.xlu0 %722
        %724 = vrot.lane.b32.xlu0 %v716, 103
        %v725 = vpop.permute.xlu0 %724
        %vm726 = vcmask 842752
        %v727 = vsel %vm726, %v719, %v721
        %v728 = vsel %vm726, %v721, %v723
        %v729 = vsel %vm726, %v723, %v725
        %v731 = vsel %vm423, %v707, 0
        %v734 = vsel %vm427, %v727, 0
        %v737 = vsel %vm427, %v728, 0
        %v740 = vsel %vm427, %v729, 0
        %742 = vmatpush.bf16.msra.mxu0 0
        %743 = vmatpush.bf16.msra.mxu0 0
        %744 = vmatpush.bf16.msra.mxu0 0
        %745 = vmatpush.bf16.msra.mxu0 0
        %746 = vmatpush.bf16.msra.mxu0 0
        %747 = vmatpush.bf16.msra.mxu0 0
        %748 = vmatpush.bf16.msra.mxu0 0
        %749 = vmatpush.bf16.msra.mxu0 %v734
        %750 = vmatmul.bf16.gmra.mxu0 %v731
        %v751 = vpop.f32.mrf.mxu0
        %v752 = vadd.f32 0.0, %v751
        %v753 = vpop.f32.mrf.mxu0
        %v754 = vadd.f32 0.0, %v753
        %755 = vdwg.mxu0
        %756 = vmatpush.bf16.msra.mxu0 0
        %757 = vmatpush.bf16.msra.mxu0 0
        %758 = vmatpush.bf16.msra.mxu0 0
        %759 = vmatpush.bf16.msra.mxu0 0
        %760 = vmatpush.bf16.msra.mxu0 0
        %761 = vmatpush.bf16.msra.mxu0 0
        %762 = vmatpush.bf16.msra.mxu0 0
        %763 = vmatpush.bf16.msra.mxu0 %v737
        %764 = vmatmul.bf16.gmra.mxu0 %v731
        %v765 = vpop.f32.mrf.mxu0
        %v766 = vadd.f32 0.0, %v765
        %v767 = vpop.f32.mrf.mxu0
        %v768 = vadd.f32 0.0, %v767
        %769 = vdwg.mxu0
        %770 = vmatpush.bf16.msra.mxu0 0
        %771 = vmatpush.bf16.msra.mxu0 0
        %772 = vmatpush.bf16.msra.mxu0 0
        %773 = vmatpush.bf16.msra.mxu0 0
        %774 = vmatpush.bf16.msra.mxu0 0
        %775 = vmatpush.bf16.msra.mxu0 0
        %776 = vmatpush.bf16.msra.mxu0 0
        %777 = vmatpush.bf16.msra.mxu0 %v740
        %778 = vmatmul.bf16.gmra.mxu0 %v731
        %v779 = vpop.f32.mrf.mxu0
        %v780 = vadd.f32 0.0, %v779
        %v781 = vpop.f32.mrf.mxu0
        %v782 = vadd.f32 0.0, %v781
        %783 = vdwg.mxu0
        %v784 = vadd.f32 %v699, %v752
        %v785 = vadd.f32 %v700, %v766
        %v786 = vadd.f32 %v701, %v780
        %v787 = vadd.f32 %v702, %v754
        %v788 = vadd.f32 %v703, %v768
        %v789 = vadd.f32 %v704, %v782
        %v790 = vld [vmem:[%s264] sm:$0xff]
        %791 = vrot.lane.b32.xlu0 %v398, 108
        %v792 = vpop.permute.xlu0 %791
        %794 = vst [vmem:[#allocation1] ss:$4 sm:$0xff] %v790
        %v795 = vld.sshfl [vmem:[#allocation1] sm:$0xff pattern:$0x73625140]
        %v797 = vld.sshfl [vmem:[#allocation1 + $0x8] sm:$0xff pattern:$0x73625140]
        %v799 = vld.sshfl [vmem:[#allocation1 + $0x10] sm:$0xff pattern:$0x73625140]
        %v801 = vld.sshfl [vmem:[#allocation1 + $0x18] sm:$0xff pattern:$0x73625140]
        %803 = vrot.lane.b32.xlu0 %v795, 102
        %v804 = vpop.permute.xlu0 %803
        %805 = vrot.lane.b32.xlu0 %v797, 102
        %v806 = vpop.permute.xlu0 %805
        %807 = vrot.lane.b32.xlu0 %v799, 102
        %v808 = vpop.permute.xlu0 %807
        %809 = vrot.lane.b32.xlu0 %v801, 102
        %v810 = vpop.permute.xlu0 %809
        %vm811 = vcmask 834560
        %v812 = vsel %vm811, %v804, %v806
        %v813 = vsel %vm811, %v806, %v808
        %v814 = vsel %vm811, %v808, %v810
        %v816 = vsel %vm423, %v792, 0
        %v819 = vsel %vm427, %v812, 0
        %v822 = vsel %vm427, %v813, 0
        %v825 = vsel %vm427, %v814, 0
        %827 = vmatpush.bf16.msra.mxu0 0
        %828 = vmatpush.bf16.msra.mxu0 0
        %829 = vmatpush.bf16.msra.mxu0 0
        %830 = vmatpush.bf16.msra.mxu0 0
        %831 = vmatpush.bf16.msra.mxu0 0
        %832 = vmatpush.bf16.msra.mxu0 0
        %833 = vmatpush.bf16.msra.mxu0 0
        %834 = vmatpush.bf16.msra.mxu0 %v819
        %835 = vmatmul.bf16.gmra.mxu0 %v816
        %v836 = vpop.f32.mrf.mxu0
        %v837 = vadd.f32 0.0, %v836
        %v838 = vpop.f32.mrf.mxu0
        %v839 = vadd.f32 0.0, %v838
        %840 = vdwg.mxu0
        %841 = vmatpush.bf16.msra.mxu0 0
        %842 = vmatpush.bf16.msra.mxu0 0
        %843 = vmatpush.bf16.msra.mxu0 0
        %844 = vmatpush.bf16.msra.mxu0 0
        %845 = vmatpush.bf16.msra.mxu0 0
        %846 = vmatpush.bf16.msra.mxu0 0
        %847 = vmatpush.bf16.msra.mxu0 0
        %848 = vmatpush.bf16.msra.mxu0 %v822
        %849 = vmatmul.bf16.gmra.mxu0 %v816
        %v850 = vpop.f32.mrf.mxu0
        %v851 = vadd.f32 0.0, %v850
        %v852 = vpop.f32.mrf.mxu0
        %v853 = vadd.f32 0.0, %v852
        %854 = vdwg.mxu0
        %855 = vmatpush.bf16.msra.mxu0 0
        %856 = vmatpush.bf16.msra.mxu0 0
        %857 = vmatpush.bf16.msra.mxu0 0
        %858 = vmatpush.bf16.msra.mxu0 0
        %859 = vmatpush.bf16.msra.mxu0 0
        %860 = vmatpush.bf16.msra.mxu0 0
        %861 = vmatpush.bf16.msra.mxu0 0
        %862 = vmatpush.bf16.msra.mxu0 %v825
        %863 = vmatmul.bf16.gmra.mxu0 %v816
        %v864 = vpop.f32.mrf.mxu0
        %v865 = vadd.f32 0.0, %v864
        %v866 = vpop.f32.mrf.mxu0
        %v867 = vadd.f32 0.0, %v866
        %868 = vdwg.mxu0
        %v869 = vadd.f32 %v784, %v837
        %v870 = vadd.f32 %v785, %v851
        %v871 = vadd.f32 %v786, %v865
        %v872 = vadd.f32 %v787, %v839
        %v873 = vadd.f32 %v788, %v853
        %v874 = vadd.f32 %v789, %v867
        %v875 = vld [vmem:[%s264] sm:$0xff]
        %876 = vrot.lane.b32.xlu0 %v398, 104
        %v877 = vpop.permute.xlu0 %876
        %879 = vst [vmem:[#allocation1] ss:$4 sm:$0xff] %v875
        %v880 = vld.sshfl [vmem:[#allocation1] sm:$0xff pattern:$0x73625140]
        %v882 = vld.sshfl [vmem:[#allocation1 + $0x8] sm:$0xff pattern:$0x73625140]
        %v884 = vld.sshfl [vmem:[#allocation1 + $0x10] sm:$0xff pattern:$0x73625140]
        %v886 = vld.sshfl [vmem:[#allocation1 + $0x18] sm:$0xff pattern:$0x73625140]
        %888 = vrot.lane.b32.xlu0 %v880, 80
        %v889 = vpop.permute.xlu0 %888
        %890 = vrot.lane.b32.xlu0 %v882, 80
        %v891 = vpop.permute.xlu0 %890
        %892 = vrot.lane.b32.xlu0 %v884, 80
        %v893 = vpop.permute.xlu0 %892
        %894 = vrot.lane.b32.xlu0 %v886, 80
        %v895 = vpop.permute.xlu0 %894
        %vm896 = vcmask 654336
        %v897 = vsel %vm896, %v889, %v891
        %v898 = vsel %vm896, %v891, %v893
        %v899 = vsel %vm896, %v893, %v895
        %v901 = vsel %vm423, %v877, 0
        %v904 = vsel %vm427, %v897, 0
        %v907 = vsel %vm427, %v898, 0
        %v910 = vsel %vm427, %v899, 0
        %912 = vmatpush.bf16.msra.mxu0 0
        %913 = vmatpush.bf16.msra.mxu0 0
        %914 = vmatpush.bf16.msra.mxu0 0
        %915 = vmatpush.bf16.msra.mxu0 0
        %916 = vmatpush.bf16.msra.mxu0 0
        %917 = vmatpush.bf16.msra.mxu0 0
        %918 = vmatpush.bf16.msra.mxu0 0
        %919 = vmatpush.bf16.msra.mxu0 %v904
        %920 = vmatmul.bf16.gmra.mxu0 %v901
        %v921 = vpop.f32.mrf.mxu0
        %v922 = vadd.f32 0.0, %v921
        %v923 = vpop.f32.mrf.mxu0
        %v924 = vadd.f32 0.0, %v923
        %925 = vdwg.mxu0
        %926 = vmatpush.bf16.msra.mxu0 0
        %927 = vmatpush.bf16.msra.mxu0 0
        %928 = vmatpush.bf16.msra.mxu0 0
        %929 = vmatpush.bf16.msra.mxu0 0
        %930 = vmatpush.bf16.msra.mxu0 0
        %931 = vmatpush.bf16.msra.mxu0 0
        %932 = vmatpush.bf16.msra.mxu0 0
        %933 = vmatpush.bf16.msra.mxu0 %v907
        %934 = vmatmul.bf16.gmra.mxu0 %v901
        %v935 = vpop.f32.mrf.mxu0
        %v936 = vadd.f32 0.0, %v935
        %v937 = vpop.f32.mrf.mxu0
        %v938 = vadd.f32 0.0, %v937
        %939 = vdwg.mxu0
        %940 = vmatpush.bf16.msra.mxu0 0
        %941 = vmatpush.bf16.msra.mxu0 0
        %942 = vmatpush.bf16.msra.mxu0 0
        %943 = vmatpush.bf16.msra.mxu0 0
        %944 = vmatpush.bf16.msra.mxu0 0
        %945 = vmatpush.bf16.msra.mxu0 0
        %946 = vmatpush.bf16.msra.mxu0 0
        %947 = vmatpush.bf16.msra.mxu0 %v910
        %948 = vmatmul.bf16.gmra.mxu0 %v901
        %v949 = vpop.f32.mrf.mxu0
        %v950 = vadd.f32 0.0, %v949
        %v951 = vpop.f32.mrf.mxu0
        %v952 = vadd.f32 0.0, %v951
        %953 = vdwg.mxu0
        %v954 = vadd.f32 %v869, %v922
        %v955 = vadd.f32 %v870, %v936
        %v956 = vadd.f32 %v871, %v950
        %v957 = vadd.f32 %v872, %v924
        %v958 = vadd.f32 %v873, %v938
        %v959 = vadd.f32 %v874, %v952
        %v960 = vld [vmem:[%s264] sm:$0xff]
        %961 = vrot.lane.b32.xlu0 %v398, 100
        %v962 = vpop.permute.xlu0 %961
        %964 = vst [vmem:[#allocation1] ss:$4 sm:$0xff] %v960
        %v965 = vld.sshfl [vmem:[#allocation1] sm:$0xff pattern:$0x73625140]
        %v967 = vld.sshfl [vmem:[#allocation1 + $0x8] sm:$0xff pattern:$0x73625140]
        %v969 = vld.sshfl [vmem:[#allocation1 + $0x10] sm:$0xff pattern:$0x73625140]
        %v971 = vld.sshfl [vmem:[#allocation1 + $0x18] sm:$0xff pattern:$0x73625140]
        %973 = vrot.lane.b32.xlu0 %v965, 79
        %v974 = vpop.permute.xlu0 %973
        %975 = vrot.lane.b32.xlu0 %v967, 79
        %v976 = vpop.permute.xlu0 %975
        %977 = vrot.lane.b32.xlu0 %v969, 79
        %v978 = vpop.permute.xlu0 %977
        %979 = vrot.lane.b32.xlu0 %v971, 79
        %v980 = vpop.permute.xlu0 %979
        %vm981 = vcmask 646144
        %v982 = vsel %vm981, %v974, %v976
        %v983 = vsel %vm981, %v976, %v978
        %v984 = vsel %vm981, %v978, %v980
        %v986 = vsel %vm423, %v962, 0
        %v989 = vsel %vm427, %v982, 0
        %v992 = vsel %vm427, %v983, 0
        %v995 = vsel %vm427, %v984, 0
        %997 = vmatpush.bf16.msra.mxu0 0
        %998 = vmatpush.bf16.msra.mxu0 0
        %999 = vmatpush.bf16.msra.mxu0 0
        %1000 = vmatpush.bf16.msra.mxu0 0
        %1001 = vmatpush.bf16.msra.mxu0 0
        %1002 = vmatpush.bf16.msra.mxu0 0
        %1003 = vmatpush.bf16.msra.mxu0 0
        %1004 = vmatpush.bf16.msra.mxu0 %v989
        %1005 = vmatmul.bf16.gmra.mxu0 %v986
        %v1006 = vpop.f32.mrf.mxu0
        %v1007 = vadd.f32 0.0, %v1006
        %v1008 = vpop.f32.mrf.mxu0
        %v1009 = vadd.f32 0.0, %v1008
        %1010 = vdwg.mxu0
        %1011 = vmatpush.bf16.msra.mxu0 0
        %1012 = vmatpush.bf16.msra.mxu0 0
        %1013 = vmatpush.bf16.msra.mxu0 0
        %1014 = vmatpush.bf16.msra.mxu0 0
        %1015 = vmatpush.bf16.msra.mxu0 0
        %1016 = vmatpush.bf16.msra.mxu0 0
        %1017 = vmatpush.bf16.msra.mxu0 0
        %1018 = vmatpush.bf16.msra.mxu0 %v992
        %1019 = vmatmul.bf16.gmra.mxu0 %v986
        %v1020 = vpop.f32.mrf.mxu0
        %v1021 = vadd.f32 0.0, %v1020
        %v1022 = vpop.f32.mrf.mxu0
        %v1023 = vadd.f32 0.0, %v1022
        %1024 = vdwg.mxu0
        %1025 = vmatpush.bf16.msra.mxu0 0
        %1026 = vmatpush.bf16.msra.mxu0 0
        %1027 = vmatpush.bf16.msra.mxu0 0
        %1028 = vmatpush.bf16.msra.mxu0 0
        %1029 = vmatpush.bf16.msra.mxu0 0
        %1030 = vmatpush.bf16.msra.mxu0 0
        %1031 = vmatpush.bf16.msra.mxu0 0
        %1032 = vmatpush.bf16.msra.mxu0 %v995
        %1033 = vmatmul.bf16.gmra.mxu0 %v986
        %v1034 = vpop.f32.mrf.mxu0
        %v1035 = vadd.f32 0.0, %v1034
        %v1036 = vpop.f32.mrf.mxu0
        %v1037 = vadd.f32 0.0, %v1036
        %1038 = vdwg.mxu0
        %v1039 = vadd.f32 %v954, %v1007
        %v1040 = vadd.f32 %v955, %v1021
        %v1041 = vadd.f32 %v956, %v1035
        %v1042 = vadd.f32 %v957, %v1009
        %v1043 = vadd.f32 %v958, %v1023
        %v1044 = vadd.f32 %v959, %v1037
        %v1045 = vld [vmem:[%s264] sm:$0xff]
        %1046 = vrot.lane.b32.xlu0 %v398, 96
        %v1047 = vpop.permute.xlu0 %1046
        %1049 = vst [vmem:[#allocation1] ss:$4 sm:$0xff] %v1045
        %v1050 = vld.sshfl [vmem:[#allocation1] sm:$0xff pattern:$0x73625140]
        %v1052 = vld.sshfl [vmem:[#allocation1 + $0x8] sm:$0xff pattern:$0x73625140]
        %v1054 = vld.sshfl [vmem:[#allocation1 + $0x10] sm:$0xff pattern:$0x73625140]
        %v1056 = vld.sshfl [vmem:[#allocation1 + $0x18] sm:$0xff pattern:$0x73625140]
        %1058 = vrot.lane.b32.xlu0 %v1050, 78
        %v1059 = vpop.permute.xlu0 %1058
        %1060 = vrot.lane.b32.xlu0 %v1052, 78
        %v1061 = vpop.permute.xlu0 %1060
        %1062 = vrot.lane.b32.xlu0 %v1054, 78
        %v1063 = vpop.permute.xlu0 %1062
        %1064 = vrot.lane.b32.xlu0 %v1056, 78
        %v1065 = vpop.permute.xlu0 %1064
        %vm1066 = vcmask 637952
        %v1067 = vsel %vm1066, %v1059, %v1061
        %v1068 = vsel %vm1066, %v1061, %v1063
        %v1069 = vsel %vm1066, %v1063, %v1065
        %v1071 = vsel %vm423, %v1047, 0
        %v1074 = vsel %vm427, %v1067, 0
        %v1077 = vsel %vm427, %v1068, 0
        %v1080 = vsel %vm427, %v1069, 0
        %1082 = vmatpush.bf16.msra.mxu0 0
        %1083 = vmatpush.bf16.msra.mxu0 0
        %1084 = vmatpush.bf16.msra.mxu0 0
        %1085 = vmatpush.bf16.msra.mxu0 0
        %1086 = vmatpush.bf16.msra.mxu0 0
        %1087 = vmatpush.bf16.msra.mxu0 0
        %1088 = vmatpush.bf16.msra.mxu0 0
        %1089 = vmatpush.bf16.msra.mxu0 %v1074
        %1090 = vmatmul.bf16.gmra.mxu0 %v1071
        %v1091 = vpop.f32.mrf.mxu0
        %v1092 = vadd.f32 0.0, %v1091
        %v1093 = vpop.f32.mrf.mxu0
        %v1094 = vadd.f32 0.0, %v1093
        %1095 = vdwg.mxu0
        %1096 = vmatpush.bf16.msra.mxu0 0
        %1097 = vmatpush.bf16.msra.mxu0 0
        %1098 = vmatpush.bf16.msra.mxu0 0
        %1099 = vmatpush.bf16.msra.mxu0 0
        %1100 = vmatpush.bf16.msra.mxu0 0
        %1101 = vmatpush.bf16.msra.mxu0 0
        %1102 = vmatpush.bf16.msra.mxu0 0
        %1103 = vmatpush.bf16.msra.mxu0 %v1077
        %1104 = vmatmul.bf16.gmra.mxu0 %v1071
        %v1105 = vpop.f32.mrf.mxu0
        %v1106 = vadd.f32 0.0, %v1105
        %v1107 = vpop.f32.mrf.mxu0
        %v1108 = vadd.f32 0.0, %v1107
        %1109 = vdwg.mxu0
        %1110 = vmatpush.bf16.msra.mxu0 0
        %1111 = vmatpush.bf16.msra.mxu0 0
        %1112 = vmatpush.bf16.msra.mxu0 0
        %1113 = vmatpush.bf16.msra.mxu0 0
        %1114 = vmatpush.bf16.msra.mxu0 0
        %1115 = vmatpush.bf16.msra.mxu0 0
        %1116 = vmatpush.bf16.msra.mxu0 0
        %1117 = vmatpush.bf16.msra.mxu0 %v1080
        %1118 = vmatmul.bf16.gmra.mxu0 %v1071
        %v1119 = vpop.f32.mrf.mxu0
        %v1120 = vadd.f32 0.0, %v1119
        %v1121 = vpop.f32.mrf.mxu0
        %v1122 = vadd.f32 0.0, %v1121
        %1123 = vdwg.mxu0
        %v1124 = vadd.f32 %v1039, %v1092
        %v1125 = vadd.f32 %v1040, %v1106
        %v1126 = vadd.f32 %v1041, %v1120
        %v1127 = vadd.f32 %v1042, %v1094
        %v1128 = vadd.f32 %v1043, %v1108
        %v1129 = vadd.f32 %v1044, %v1122
        %1131 = vset.pattern.permute.xlu0 0
        %1132 = vperm.xlu0 %1131, %v277
        %v1133 = vpop.permute.xlu0 %1132
        %1136 = vset.pattern.permute.xlu0 0
        %1137 = vperm.xlu0 %1136, %v278
        %v1138 = vpop.permute.xlu0 %1137
        %v1140 = vadd.f32 %v1124, %v1133
        %v1141 = vadd.f32 %v1125, %v1133
        %v1142 = vadd.f32 %v1126, %v1133
        %v1143 = vadd.f32 %v1127, %v1138
        %v1144 = vadd.f32 %v1128, %v1138
        %v1145 = vadd.f32 %v1129, %v1138
        %v1146 = vmax.f32 %v1140, 0.0
        %v1147 = vmax.f32 %v1141, 0.0
        %v1148 = vmax.f32 %v1142, 0.0
        %v1149 = vmax.f32 %v1143, 0.0
        %v1150 = vmax.f32 %v1144, 0.0
        %v1151 = vmax.f32 %v1145, 0.0
        %v1152 = vld [vmem:[%s269] sm:$0xff]
        %v1153 = vld [vmem:[%s269 + $0x8] sm:$0xff]
        %1155 = vset.pattern.permute.xlu0 0
        %1156 = vperm.xlu0 %1155, %v1152
        %v1157 = vpop.permute.xlu0 %1156
        %1160 = vset.pattern.permute.xlu0 0
        %1161 = vperm.xlu0 %1160, %v1153
        %v1162 = vpop.permute.xlu0 %1161
        %v1164 = vmul.f32 %v1146, %v1157
        %v1165 = vmul.f32 %v1147, %v1157
        %v1166 = vmul.f32 %v1148, %v1157
        %v1167 = vmul.f32 %v1149, %v1162
        %v1168 = vmul.f32 %v1150, %v1162
        %v1169 = vmul.f32 %v1151, %v1162
        %v1170 = vsel %vm389, 1, 0
        %v1171 = vsel %vm390, 1, 0
        %v1172 = vsel %vm391, 1, 0
        %vm1173 = vcmp.eq.s32.totalorder %v1170, 1
        %vm1174 = vcmp.eq.s32.totalorder %v1171, 1
        %vm1175 = vcmp.eq.s32.totalorder %v1172, 1
        %v1176 = vsel %vm1173, %v1164, 0.0
        %v1177 = vsel %vm1174, %v1165, 0.0
        %v1178 = vsel %vm1175, %v1166, 0.0
        %v1179 = vsel %vm1173, %v1167, 0.0
        %v1180 = vsel %vm1174, %v1168, 0.0
        %v1181 = vsel %vm1175, %v1169, 0.0
        %vm1182 = vcmask 199680
        %1183 = vst.msk [vmem:[#allocation2] sm:$0xf] %vm1182, 0
        %1184 = vst.msk [vmem:[#allocation2 + $0x10] sm:$0xf] %vm1182, 0
        %vm1185 = vcmask 584904
        %1186 = vst.msk [vmem:[#allocation2 + $0xc] sm:$0xf] %vm1185, 0
        %1187 = vst.msk [vmem:[#allocation2 + $0x1c] sm:$0xf] %vm1185, 0
        %v1188 = vpack.c.bf16 %v1177, %v1176
        %v1189 = vpack.c.bf16 %v1178, %v1178
        %v1190 = vpack.c.bf16 %v1180, %v1179
        %v1191 = vpack.c.bf16 %v1181, %v1181
        %1196 = vrot.lane.b32.xlu0 %v1188, 25
        %v1197 = vpop.permute.xlu0 %1196
        %1198 = vrot.lane.b32.xlu0 %v1189, 25
        %v1199 = vpop.permute.xlu0 %1198
        %1200 = vrot.lane.b32.xlu0 %v1190, 25
        %v1201 = vpop.permute.xlu0 %1200
        %1202 = vrot.lane.b32.xlu0 %v1191, 25
        %v1203 = vpop.permute.xlu0 %1202
        %v1204 = vrot.slane %v1197, 4
        %v1205 = vrot.slane %v1199, 4
        %v1206 = vrot.slane %v1201, 4
        %v1207 = vrot.slane %v1203, 4
        %vm1208 = vcmask 203776
        %v1209 = vsel %vm1208, %v1204, %v1197
        %vm1210 = vcmask 1043456
        %v1211 = vsel %vm1210, %v1204, %v1205
        %v1212 = vsel %vm1208, %v1211, %v1199
        %v1213 = vsel %vm1208, %v1206, %v1201
        %v1214 = vsel %vm1210, %v1206, %v1207
        %v1215 = vsel %vm1208, %v1214, %v1203
        %vm1220 = vcmask 1043656
        %vm1221 = vcmask 1047556
        %vm1222 = vmor %vm1221, %vm1220
        %1223 = vst.msk [vmem:[#allocation2] sm:$0xff] %vm1222, %v1209
        %vm1224 = vcmask 1043456
        %vm1225 = vcmask 203780
        %vm1226 = vmor %vm1225, %vm1224
        %1227 = vst.msk [vmem:[#allocation2 + $0x8] sm:$0xff] %vm1226, %v1212
        %1228 = vst.msk [vmem:[#allocation2 + $0x10] sm:$0xff] %vm1222, %v1213
        %1229 = vst.msk [vmem:[#allocation2 + $0x18] sm:$0xff] %vm1226, %v1215
        %v1230 = vld [vmem:[#allocation2] sm:$0xff]
        %v1231 = vld [vmem:[#allocation2 + $0x8] sm:$0xf]
        %v1232 = vld [vmem:[#allocation2 + $0x10] sm:$0xff]
        %v1233 = vld [vmem:[#allocation2 + $0x18] sm:$0xf]
        %v1234 = vld [vmem:[#allocation2 + $0x8] sm:$0xff]
        %v1235 = vld [vmem:[#allocation2 + $0x18] sm:$0xff]
        %v1240 = vunpack.c.l.b16 %v273
        %v1241 = vunpack.c.l.b16 %v274
        %v1242 = vunpack.c.l.b16 %v275
        %v1243 = vunpack.c.l.b16 %v276
        %v1244 = vpack.c.b16 %v1241, %v1240
        %v1245 = vpack.c.b16 %v1243, %v1242
        %1246 = vrot.lane.b32.xlu0 %v1244, 112
        %v1247 = vpop.permute.xlu0 %1246
        %1248 = vrot.lane.b32.xlu0 %v1245, 112
        %v1249 = vpop.permute.xlu0 %1248
        %v1254 = vunpack.c.l.b16 %v1230
        %v1255 = vunpack.c.h.b16 %v1230
        %v1256 = vunpack.c.l.b16 %v1234
        %v1257 = vunpack.c.h.b16 %v1234
        %v1258 = vunpack.c.l.b16 %v1232
        %v1259 = vunpack.c.h.b16 %v1232
        %v1260 = vunpack.c.l.b16 %v1235
        %v1261 = vunpack.c.h.b16 %v1235
        %v1262 = vpack.c.b16 %v1258, %v1254
        %v1263 = vpack.c.b16 %v1259, %v1255
        %v1264 = vpack.c.b16 %v1260, %v1256
        %v1265 = vpack.c.b16 %v1261, %v1257
        %1266 = vrot.lane.b32.xlu0 %v1262, 127
        %v1267 = vpop.permute.xlu0 %1266
        %1268 = vrot.lane.b32.xlu0 %v1263, 127
        %v1269 = vpop.permute.xlu0 %1268
        %1270 = vrot.lane.b32.xlu0 %v1264, 127
        %v1271 = vpop.permute.xlu0 %1270
        %1272 = vrot.lane.b32.xlu0 %v1265, 127
        %v1273 = vpop.permute.xlu0 %1272
        %v1274 = vsel %vm419, %v1267, %v1269
        %v1275 = vsel %vm419, %v1269, %v1271
        %v1276 = vsel %vm419, %v1271, %v1273
        %vm1280 = vcmask 130048
        %v1282 = vsel %vm1280, %v1247, 0
        %v1285 = vsel %vm1280, %v1249, 0
        %1287 = vmatpush.bf16.msra.mxu0 0
        %1288 = vmatpush.bf16.msra.mxu0 0
        %1289 = vmatpush.bf16.msra.mxu0 0
        %1290 = vmatpush.bf16.msra.mxu0 0
        %1291 = vmatpush.bf16.msra.mxu0 0
        %1292 = vmatpush.bf16.msra.mxu0 0
        %1293 = vmatpush.bf16.msra.mxu0 0
        %1294 = vmatpush.bf16.msra.mxu0 %v1274
        %1295 = vmatmul.bf16.gmra.mxu0 %v1282
        %v1296 = vpop.f32.mrf.mxu0
        %v1297 = vadd.f32 0.0, %v1296
        %v1298 = vpop.f32.mrf.mxu0
        %v1299 = vadd.f32 0.0, %v1298
        %1300 = vmatmul.bf16.gmra.mxu0 %v1285
        %v1301 = vpop.f32.mrf.mxu0
        %v1302 = vadd.f32 0.0, %v1301
        %v1303 = vpop.f32.mrf.mxu0
        %v1304 = vadd.f32 0.0, %v1303
        %1305 = vdwg.mxu0
        %1306 = vmatpush.bf16.msra.mxu0 0
        %1307 = vmatpush.bf16.msra.mxu0 0
        %1308 = vmatpush.bf16.msra.mxu0 0
        %1309 = vmatpush.bf16.msra.mxu0 0
        %1310 = vmatpush.bf16.msra.mxu0 0
        %1311 = vmatpush.bf16.msra.mxu0 0
        %1312 = vmatpush.bf16.msra.mxu0 0
        %1313 = vmatpush.bf16.msra.mxu0 %v1275
        %1314 = vmatmul.bf16.gmra.mxu0 %v1282
        %v1315 = vpop.f32.mrf.mxu0
        %v1316 = vadd.f32 0.0, %v1315
        %v1317 = vpop.f32.mrf.mxu0
        %v1318 = vadd.f32 0.0, %v1317
        %1319 = vmatmul.bf16.gmra.mxu0 %v1285
        %v1320 = vpop.f32.mrf.mxu0
        %v1321 = vadd.f32 0.0, %v1320
        %v1322 = vpop.f32.mrf.mxu0
        %v1323 = vadd.f32 0.0, %v1322
        %1324 = vdwg.mxu0
        %1325 = vmatpush.bf16.msra.mxu0 0
        %1326 = vmatpush.bf16.msra.mxu0 0
        %1327 = vmatpush.bf16.msra.mxu0 0
        %1328 = vmatpush.bf16.msra.mxu0 0
        %1329 = vmatpush.bf16.msra.mxu0 0
        %1330 = vmatpush.bf16.msra.mxu0 0
        %1331 = vmatpush.bf16.msra.mxu0 0
        %1332 = vmatpush.bf16.msra.mxu0 %v1276
        %1333 = vmatmul.bf16.gmra.mxu0 %v1282
        %v1334 = vpop.f32.mrf.mxu0
        %v1335 = vadd.f32 0.0, %v1334
        %v1336 = vpop.f32.mrf.mxu0
        %v1337 = vadd.f32 0.0, %v1336
        %1338 = vmatmul.bf16.gmra.mxu0 %v1285
        %v1339 = vpop.f32.mrf.mxu0
        %v1340 = vadd.f32 0.0, %v1339
        %v1341 = vpop.f32.mrf.mxu0
        %v1342 = vadd.f32 0.0, %v1341
        %1343 = vdwg.mxu0
        %v1346 = vunpack.c.l.b16 %v1231
        %v1347 = vunpack.c.l.b16 %v1233
        %v1348 = vpack.c.b16 %v1347, %v1346
        %v1353 = vsel %vm1280, %v1244, 0
        %v1356 = vsel %vm1280, %v1245, 0
        %1358 = vmatpush.bf16.msra.mxu0 0
        %1359 = vmatpush.bf16.msra.mxu0 0
        %1360 = vmatpush.bf16.msra.mxu0 0
        %1361 = vmatpush.bf16.msra.mxu0 0
        %1362 = vmatpush.bf16.msra.mxu0 0
        %1363 = vmatpush.bf16.msra.mxu0 0
        %1364 = vmatpush.bf16.msra.mxu0 0
        %1365 = vmatpush.bf16.msra.mxu0 %v1262
        %1366 = vmatmul.bf16.gmra.mxu0 %v1353
        %v1367 = vpop.f32.mrf.mxu0
        %v1368 = vadd.f32 %v1297, %v1367
        %v1369 = vpop.f32.mrf.mxu0
        %v1370 = vadd.f32 %v1299, %v1369
        %1371 = vmatmul.bf16.gmra.mxu0 %v1356
        %v1372 = vpop.f32.mrf.mxu0
        %v1373 = vadd.f32 %v1302, %v1372
        %v1374 = vpop.f32.mrf.mxu0
        %v1375 = vadd.f32 %v1304, %v1374
        %1376 = vdwg.mxu0
        %1377 = vmatpush.bf16.msra.mxu0 0
        %1378 = vmatpush.bf16.msra.mxu0 0
        %1379 = vmatpush.bf16.msra.mxu0 0
        %1380 = vmatpush.bf16.msra.mxu0 0
        %1381 = vmatpush.bf16.msra.mxu0 0
        %1382 = vmatpush.bf16.msra.mxu0 0
        %1383 = vmatpush.bf16.msra.mxu0 0
        %1384 = vmatpush.bf16.msra.mxu0 %v1263
        %1385 = vmatmul.bf16.gmra.mxu0 %v1353
        %v1386 = vpop.f32.mrf.mxu0
        %v1387 = vadd.f32 %v1316, %v1386
        %v1388 = vpop.f32.mrf.mxu0
        %v1389 = vadd.f32 %v1318, %v1388
        %1390 = vmatmul.bf16.gmra.mxu0 %v1356
        %v1391 = vpop.f32.mrf.mxu0
        %v1392 = vadd.f32 %v1321, %v1391
        %v1393 = vpop.f32.mrf.mxu0
        %v1394 = vadd.f32 %v1323, %v1393
        %1395 = vdwg.mxu0
        %1396 = vmatpush.bf16.msra.mxu0 0
        %1397 = vmatpush.bf16.msra.mxu0 0
        %1398 = vmatpush.bf16.msra.mxu0 0
        %1399 = vmatpush.bf16.msra.mxu0 0
        %1400 = vmatpush.bf16.msra.mxu0 0
        %1401 = vmatpush.bf16.msra.mxu0 0
        %1402 = vmatpush.bf16.msra.mxu0 0
        %1403 = vmatpush.bf16.msra.mxu0 %v1348
        %1404 = vmatmul.bf16.gmra.mxu0 %v1353
        %v1405 = vpop.f32.mrf.mxu0
        %v1406 = vadd.f32 %v1335, %v1405
        %v1407 = vpop.f32.mrf.mxu0
        %v1408 = vadd.f32 %v1337, %v1407
        %1409 = vmatmul.bf16.gmra.mxu0 %v1356
        %v1410 = vpop.f32.mrf.mxu0
        %v1411 = vadd.f32 %v1340, %v1410
        %v1412 = vpop.f32.mrf.mxu0
        %v1413 = vadd.f32 %v1342, %v1412
        %1414 = vdwg.mxu0
        %1415 = vrot.lane.b32.xlu0 %v1244, 96
        %v1416 = vpop.permute.xlu0 %1415
        %1417 = vrot.lane.b32.xlu0 %v1245, 96
        %v1418 = vpop.permute.xlu0 %1417
        %1419 = vrot.lane.b32.xlu0 %v1262, 126
        %v1420 = vpop.permute.xlu0 %1419
        %1421 = vrot.lane.b32.xlu0 %v1263, 126
        %v1422 = vpop.permute.xlu0 %1421
        %1423 = vrot.lane.b32.xlu0 %v1264, 126
        %v1424 = vpop.permute.xlu0 %1423
        %1425 = vrot.lane.b32.xlu0 %v1265, 126
        %v1426 = vpop.permute.xlu0 %1425
        %v1427 = vsel %vm556, %v1420, %v1422
        %v1428 = vsel %vm556, %v1422, %v1424
        %v1429 = vsel %vm556, %v1424, %v1426
        %v1434 = vsel %vm1280, %v1416, 0
        %v1437 = vsel %vm1280, %v1418, 0
        %1439 = vmatpush.bf16.msra.mxu0 0
        %1440 = vmatpush.bf16.msra.mxu0 0
        %1441 = vmatpush.bf16.msra.mxu0 0
        %1442 = vmatpush.bf16.msra.mxu0 0
        %1443 = vmatpush.bf16.msra.mxu0 0
        %1444 = vmatpush.bf16.msra.mxu0 0
        %1445 = vmatpush.bf16.msra.mxu0 0
        %1446 = vmatpush.bf16.msra.mxu0 %v1427
        %1447 = vmatmul.bf16.gmra.mxu0 %v1434
        %v1448 = vpop.f32.mrf.mxu0
        %v1449 = vadd.f32 0.0, %v1448
        %v1450 = vpop.f32.mrf.mxu0
        %v1451 = vadd.f32 0.0, %v1450
        %1452 = vmatmul.bf16.gmra.mxu0 %v1437
        %v1453 = vpop.f32.mrf.mxu0
        %v1454 = vadd.f32 0.0, %v1453
        %v1455 = vpop.f32.mrf.mxu0
        %v1456 = vadd.f32 0.0, %v1455
        %1457 = vdwg.mxu0
        %1458 = vmatpush.bf16.msra.mxu0 0
        %1459 = vmatpush.bf16.msra.mxu0 0
        %1460 = vmatpush.bf16.msra.mxu0 0
        %1461 = vmatpush.bf16.msra.mxu0 0
        %1462 = vmatpush.bf16.msra.mxu0 0
        %1463 = vmatpush.bf16.msra.mxu0 0
        %1464 = vmatpush.bf16.msra.mxu0 0
        %1465 = vmatpush.bf16.msra.mxu0 %v1428
        %1466 = vmatmul.bf16.gmra.mxu0 %v1434
        %v1467 = vpop.f32.mrf.mxu0
        %v1468 = vadd.f32 0.0, %v1467
        %v1469 = vpop.f32.mrf.mxu0
        %v1470 = vadd.f32 0.0, %v1469
        %1471 = vmatmul.bf16.gmra.mxu0 %v1437
        %v1472 = vpop.f32.mrf.mxu0
        %v1473 = vadd.f32 0.0, %v1472
        %v1474 = vpop.f32.mrf.mxu0
        %v1475 = vadd.f32 0.0, %v1474
        %1476 = vdwg.mxu0
        %1477 = vmatpush.bf16.msra.mxu0 0
        %1478 = vmatpush.bf16.msra.mxu0 0
        %1479 = vmatpush.bf16.msra.mxu0 0
        %1480 = vmatpush.bf16.msra.mxu0 0
        %1481 = vmatpush.bf16.msra.mxu0 0
        %1482 = vmatpush.bf16.msra.mxu0 0
        %1483 = vmatpush.bf16.msra.mxu0 0
        %1484 = vmatpush.bf16.msra.mxu0 %v1429
        %1485 = vmatmul.bf16.gmra.mxu0 %v1434
        %v1486 = vpop.f32.mrf.mxu0
        %v1487 = vadd.f32 0.0, %v1486
        %v1488 = vpop.f32.mrf.mxu0
        %v1489 = vadd.f32 0.0, %v1488
        %1490 = vmatmul.bf16.gmra.mxu0 %v1437
        %v1491 = vpop.f32.mrf.mxu0
        %v1492 = vadd.f32 0.0, %v1491
        %v1493 = vpop.f32.mrf.mxu0
        %v1494 = vadd.f32 0.0, %v1493
        %1495 = vdwg.mxu0
        %v1496 = vadd.f32 %v1368, %v1449
        %v1497 = vadd.f32 %v1387, %v1468
        %v1498 = vadd.f32 %v1406, %v1487
        %v1499 = vadd.f32 %v1370, %v1451
        %v1500 = vadd.f32 %v1389, %v1470
        %v1501 = vadd.f32 %v1408, %v1489
        %v1502 = vadd.f32 %v1373, %v1454
        %v1503 = vadd.f32 %v1392, %v1473
        %v1504 = vadd.f32 %v1411, %v1492
        %v1505 = vadd.f32 %v1375, %v1456
        %v1506 = vadd.f32 %v1394, %v1475
        %v1507 = vadd.f32 %v1413, %v1494
        %1508 = vrot.lane.b32.xlu0 %v1244, 80
        %v1509 = vpop.permute.xlu0 %1508
        %1510 = vrot.lane.b32.xlu0 %v1245, 80
        %v1511 = vpop.permute.xlu0 %1510
        %1512 = vrot.lane.b32.xlu0 %v1262, 104
        %v1513 = vpop.permute.xlu0 %1512
        %1514 = vrot.lane.b32.xlu0 %v1263, 104
        %v1515 = vpop.permute.xlu0 %1514
        %1516 = vrot.lane.b32.xlu0 %v1264, 104
        %v1517 = vpop.permute.xlu0 %1516
        %1518 = vrot.lane.b32.xlu0 %v1265, 104
        %v1519 = vpop.permute.xlu0 %1518
        %v1520 = vsel %vm641, %v1513, %v1515
        %v1521 = vsel %vm641, %v1515, %v1517
        %v1522 = vsel %vm641, %v1517, %v1519
        %v1527 = vsel %vm1280, %v1509, 0
        %v1530 = vsel %vm1280, %v1511, 0
        %1532 = vmatpush.bf16.msra.mxu0 0
        %1533 = vmatpush.bf16.msra.mxu0 0
        %1534 = vmatpush.bf16.msra.mxu0 0
        %1535 = vmatpush.bf16.msra.mxu0 0
        %1536 = vmatpush.bf16.msra.mxu0 0
        %1537 = vmatpush.bf16.msra.mxu0 0
        %1538 = vmatpush.bf16.msra.mxu0 0
        %1539 = vmatpush.bf16.msra.mxu0 %v1520
        %1540 = vmatmul.bf16.gmra.mxu0 %v1527
        %v1541 = vpop.f32.mrf.mxu0
        %v1542 = vadd.f32 0.0, %v1541
        %v1543 = vpop.f32.mrf.mxu0
        %v1544 = vadd.f32 0.0, %v1543
        %1545 = vmatmul.bf16.gmra.mxu0 %v1530
        %v1546 = vpop.f32.mrf.mxu0
        %v1547 = vadd.f32 0.0, %v1546
        %v1548 = vpop.f32.mrf.mxu0
        %v1549 = vadd.f32 0.0, %v1548
        %1550 = vdwg.mxu0
        %1551 = vmatpush.bf16.msra.mxu0 0
        %1552 = vmatpush.bf16.msra.mxu0 0
        %1553 = vmatpush.bf16.msra.mxu0 0
        %1554 = vmatpush.bf16.msra.mxu0 0
        %1555 = vmatpush.bf16.msra.mxu0 0
        %1556 = vmatpush.bf16.msra.mxu0 0
        %1557 = vmatpush.bf16.msra.mxu0 0
        %1558 = vmatpush.bf16.msra.mxu0 %v1521
        %1559 = vmatmul.bf16.gmra.mxu0 %v1527
        %v1560 = vpop.f32.mrf.mxu0
        %v1561 = vadd.f32 0.0, %v1560
        %v1562 = vpop.f32.mrf.mxu0
        %v1563 = vadd.f32 0.0, %v1562
        %1564 = vmatmul.bf16.gmra.mxu0 %v1530
        %v1565 = vpop.f32.mrf.mxu0
        %v1566 = vadd.f32 0.0, %v1565
        %v1567 = vpop.f32.mrf.mxu0
        %v1568 = vadd.f32 0.0, %v1567
        %1569 = vdwg.mxu0
        %1570 = vmatpush.bf16.msra.mxu0 0
        %1571 = vmatpush.bf16.msra.mxu0 0
        %1572 = vmatpush.bf16.msra.mxu0 0
        %1573 = vmatpush.bf16.msra.mxu0 0
        %1574 = vmatpush.bf16.msra.mxu0 0
        %1575 = vmatpush.bf16.msra.mxu0 0
        %1576 = vmatpush.bf16.msra.mxu0 0
        %1577 = vmatpush.bf16.msra.mxu0 %v1522
        %1578 = vmatmul.bf16.gmra.mxu0 %v1527
        %v1579 = vpop.f32.mrf.mxu0
        %v1580 = vadd.f32 0.0, %v1579
        %v1581 = vpop.f32.mrf.mxu0
        %v1582 = vadd.f32 0.0, %v1581
        %1583 = vmatmul.bf16.gmra.mxu0 %v1530
        %v1584 = vpop.f32.mrf.mxu0
        %v1585 = vadd.f32 0.0, %v1584
        %v1586 = vpop.f32.mrf.mxu0
        %v1587 = vadd.f32 0.0, %v1586
        %1588 = vdwg.mxu0
        %v1589 = vadd.f32 %v1496, %v1542
        %v1590 = vadd.f32 %v1497, %v1561
        %v1591 = vadd.f32 %v1498, %v1580
        %v1592 = vadd.f32 %v1499, %v1544
        %v1593 = vadd.f32 %v1500, %v1563
        %v1594 = vadd.f32 %v1501, %v1582
        %v1595 = vadd.f32 %v1502, %v1547
        %v1596 = vadd.f32 %v1503, %v1566
        %v1597 = vadd.f32 %v1504, %v1585
        %v1598 = vadd.f32 %v1505, %v1549
        %v1599 = vadd.f32 %v1506, %v1568
        %v1600 = vadd.f32 %v1507, %v1587
        %1601 = vrot.lane.b32.xlu0 %v1244, 64
        %v1602 = vpop.permute.xlu0 %1601
        %1603 = vrot.lane.b32.xlu0 %v1245, 64
        %v1604 = vpop.permute.xlu0 %1603
        %1605 = vrot.lane.b32.xlu0 %v1262, 103
        %v1606 = vpop.permute.xlu0 %1605
        %1607 = vrot.lane.b32.xlu0 %v1263, 103
        %v1608 = vpop.permute.xlu0 %1607
        %1609 = vrot.lane.b32.xlu0 %v1264, 103
        %v1610 = vpop.permute.xlu0 %1609
        %1611 = vrot.lane.b32.xlu0 %v1265, 103
        %v1612 = vpop.permute.xlu0 %1611
        %v1613 = vsel %vm726, %v1606, %v1608
        %v1614 = vsel %vm726, %v1608, %v1610
        %v1615 = vsel %vm726, %v1610, %v1612
        %v1620 = vsel %vm1280, %v1602, 0
        %v1623 = vsel %vm1280, %v1604, 0
        %1625 = vmatpush.bf16.msra.mxu0 0
        %1626 = vmatpush.bf16.msra.mxu0 0
        %1627 = vmatpush.bf16.msra.mxu0 0
        %1628 = vmatpush.bf16.msra.mxu0 0
        %1629 = vmatpush.bf16.msra.mxu0 0
        %1630 = vmatpush.bf16.msra.mxu0 0
        %1631 = vmatpush.bf16.msra.mxu0 0
        %1632 = vmatpush.bf16.msra.mxu0 %v1613
        %1633 = vmatmul.bf16.gmra.mxu0 %v1620
        %v1634 = vpop.f32.mrf.mxu0
        %v1635 = vadd.f32 0.0, %v1634
        %v1636 = vpop.f32.mrf.mxu0
        %v1637 = vadd.f32 0.0, %v1636
        %1638 = vmatmul.bf16.gmra.mxu0 %v1623
        %v1639 = vpop.f32.mrf.mxu0
        %v1640 = vadd.f32 0.0, %v1639
        %v1641 = vpop.f32.mrf.mxu0
        %v1642 = vadd.f32 0.0, %v1641
        %1643 = vdwg.mxu0
        %1644 = vmatpush.bf16.msra.mxu0 0
        %1645 = vmatpush.bf16.msra.mxu0 0
        %1646 = vmatpush.bf16.msra.mxu0 0
        %1647 = vmatpush.bf16.msra.mxu0 0
        %1648 = vmatpush.bf16.msra.mxu0 0
        %1649 = vmatpush.bf16.msra.mxu0 0
        %1650 = vmatpush.bf16.msra.mxu0 0
        %1651 = vmatpush.bf16.msra.mxu0 %v1614
        %1652 = vmatmul.bf16.gmra.mxu0 %v1620
        %v1653 = vpop.f32.mrf.mxu0
        %v1654 = vadd.f32 0.0, %v1653
        %v1655 = vpop.f32.mrf.mxu0
        %v1656 = vadd.f32 0.0, %v1655
        %1657 = vmatmul.bf16.gmra.mxu0 %v1623
        %v1658 = vpop.f32.mrf.mxu0
        %v1659 = vadd.f32 0.0, %v1658
        %v1660 = vpop.f32.mrf.mxu0
        %v1661 = vadd.f32 0.0, %v1660
        %1662 = vdwg.mxu0
        %1663 = vmatpush.bf16.msra.mxu0 0
        %1664 = vmatpush.bf16.msra.mxu0 0
        %1665 = vmatpush.bf16.msra.mxu0 0
        %1666 = vmatpush.bf16.msra.mxu0 0
        %1667 = vmatpush.bf16.msra.mxu0 0
        %1668 = vmatpush.bf16.msra.mxu0 0
        %1669 = vmatpush.bf16.msra.mxu0 0
        %1670 = vmatpush.bf16.msra.mxu0 %v1615
        %1671 = vmatmul.bf16.gmra.mxu0 %v1620
        %v1672 = vpop.f32.mrf.mxu0
        %v1673 = vadd.f32 0.0, %v1672
        %v1674 = vpop.f32.mrf.mxu0
        %v1675 = vadd.f32 0.0, %v1674
        %1676 = vmatmul.bf16.gmra.mxu0 %v1623
        %v1677 = vpop.f32.mrf.mxu0
        %v1678 = vadd.f32 0.0, %v1677
        %v1679 = vpop.f32.mrf.mxu0
        %v1680 = vadd.f32 0.0, %v1679
        %1681 = vdwg.mxu0
        %v1682 = vadd.f32 %v1589, %v1635
        %v1683 = vadd.f32 %v1590, %v1654
        %v1684 = vadd.f32 %v1591, %v1673
        %v1685 = vadd.f32 %v1592, %v1637
        %v1686 = vadd.f32 %v1593, %v1656
        %v1687 = vadd.f32 %v1594, %v1675
        %v1688 = vadd.f32 %v1595, %v1640
        %v1689 = vadd.f32 %v1596, %v1659
        %v1690 = vadd.f32 %v1597, %v1678
        %v1691 = vadd.f32 %v1598, %v1642
        %v1692 = vadd.f32 %v1599, %v1661
        %v1693 = vadd.f32 %v1600, %v1680
        %1694 = vrot.lane.b32.xlu0 %v1244, 48
        %v1695 = vpop.permute.xlu0 %1694
        %1696 = vrot.lane.b32.xlu0 %v1245, 48
        %v1697 = vpop.permute.xlu0 %1696
        %1698 = vrot.lane.b32.xlu0 %v1262, 102
        %v1699 = vpop.permute.xlu0 %1698
        %1700 = vrot.lane.b32.xlu0 %v1263, 102
        %v1701 = vpop.permute.xlu0 %1700
        %1702 = vrot.lane.b32.xlu0 %v1264, 102
        %v1703 = vpop.permute.xlu0 %1702
        %1704 = vrot.lane.b32.xlu0 %v1265, 102
        %v1705 = vpop.permute.xlu0 %1704
        %v1706 = vsel %vm811, %v1699, %v1701
        %v1707 = vsel %vm811, %v1701, %v1703
        %v1708 = vsel %vm811, %v1703, %v1705
        %v1713 = vsel %vm1280, %v1695, 0
        %v1716 = vsel %vm1280, %v1697, 0
        %1718 = vmatpush.bf16.msra.mxu0 0
        %1719 = vmatpush.bf16.msra.mxu0 0
        %1720 = vmatpush.bf16.msra.mxu0 0
        %1721 = vmatpush.bf16.msra.mxu0 0
        %1722 = vmatpush.bf16.msra.mxu0 0
        %1723 = vmatpush.bf16.msra.mxu0 0
        %1724 = vmatpush.bf16.msra.mxu0 0
        %1725 = vmatpush.bf16.msra.mxu0 %v1706
        %1726 = vmatmul.bf16.gmra.mxu0 %v1713
        %v1727 = vpop.f32.mrf.mxu0
        %v1728 = vadd.f32 0.0, %v1727
        %v1729 = vpop.f32.mrf.mxu0
        %v1730 = vadd.f32 0.0, %v1729
        %1731 = vmatmul.bf16.gmra.mxu0 %v1716
        %v1732 = vpop.f32.mrf.mxu0
        %v1733 = vadd.f32 0.0, %v1732
        %v1734 = vpop.f32.mrf.mxu0
        %v1735 = vadd.f32 0.0, %v1734
        %1736 = vdwg.mxu0
        %1737 = vmatpush.bf16.msra.mxu0 0
        %1738 = vmatpush.bf16.msra.mxu0 0
        %1739 = vmatpush.bf16.msra.mxu0 0
        %1740 = vmatpush.bf16.msra.mxu0 0
        %1741 = vmatpush.bf16.msra.mxu0 0
        %1742 = vmatpush.bf16.msra.mxu0 0
        %1743 = vmatpush.bf16.msra.mxu0 0
        %1744 = vmatpush.bf16.msra.mxu0 %v1707
        %1745 = vmatmul.bf16.gmra.mxu0 %v1713
        %v1746 = vpop.f32.mrf.mxu0
        %v1747 = vadd.f32 0.0, %v1746
        %v1748 = vpop.f32.mrf.mxu0
        %v1749 = vadd.f32 0.0, %v1748
        %1750 = vmatmul.bf16.gmra.mxu0 %v1716
        %v1751 = vpop.f32.mrf.mxu0
        %v1752 = vadd.f32 0.0, %v1751
        %v1753 = vpop.f32.mrf.mxu0
        %v1754 = vadd.f32 0.0, %v1753
        %1755 = vdwg.mxu0
        %1756 = vmatpush.bf16.msra.mxu0 0
        %1757 = vmatpush.bf16.msra.mxu0 0
        %1758 = vmatpush.bf16.msra.mxu0 0
        %1759 = vmatpush.bf16.msra.mxu0 0
        %1760 = vmatpush.bf16.msra.mxu0 0
        %1761 = vmatpush.bf16.msra.mxu0 0
        %1762 = vmatpush.bf16.msra.mxu0 0
        %1763 = vmatpush.bf16.msra.mxu0 %v1708
        %1764 = vmatmul.bf16.gmra.mxu0 %v1713
        %v1765 = vpop.f32.mrf.mxu0
        %v1766 = vadd.f32 0.0, %v1765
        %v1767 = vpop.f32.mrf.mxu0
        %v1768 = vadd.f32 0.0, %v1767
        %1769 = vmatmul.bf16.gmra.mxu0 %v1716
        %v1770 = vpop.f32.mrf.mxu0
        %v1771 = vadd.f32 0.0, %v1770
        %v1772 = vpop.f32.mrf.mxu0
        %v1773 = vadd.f32 0.0, %v1772
        %1774 = vdwg.mxu0
        %v1775 = vadd.f32 %v1682, %v1728
        %v1776 = vadd.f32 %v1683, %v1747
        %v1777 = vadd.f32 %v1684, %v1766
        %v1778 = vadd.f32 %v1685, %v1730
        %v1779 = vadd.f32 %v1686, %v1749
        %v1780 = vadd.f32 %v1687, %v1768
        %v1781 = vadd.f32 %v1688, %v1733
        %v1782 = vadd.f32 %v1689, %v1752
        %v1783 = vadd.f32 %v1690, %v1771
        %v1784 = vadd.f32 %v1691, %v1735
        %v1785 = vadd.f32 %v1692, %v1754
        %v1786 = vadd.f32 %v1693, %v1773
        %1787 = vrot.lane.b32.xlu0 %v1244, 32
        %v1788 = vpop.permute.xlu0 %1787
        %1789 = vrot.lane.b32.xlu0 %v1245, 32
        %v1790 = vpop.permute.xlu0 %1789
        %1791 = vrot.lane.b32.xlu0 %v1262, 80
        %v1792 = vpop.permute.xlu0 %1791
        %1793 = vrot.lane.b32.xlu0 %v1263, 80
        %v1794 = vpop.permute.xlu0 %1793
        %1795 = vrot.lane.b32.xlu0 %v1264, 80
        %v1796 = vpop.permute.xlu0 %1795
        %1797 = vrot.lane.b32.xlu0 %v1265, 80
        %v1798 = vpop.permute.xlu0 %1797
        %v1799 = vsel %vm896, %v1792, %v1794
        %v1800 = vsel %vm896, %v1794, %v1796
        %v1801 = vsel %vm896, %v1796, %v1798
        %v1806 = vsel %vm1280, %v1788, 0
        %v1809 = vsel %vm1280, %v1790, 0
        %1811 = vmatpush.bf16.msra.mxu0 0
        %1812 = vmatpush.bf16.msra.mxu0 0
        %1813 = vmatpush.bf16.msra.mxu0 0
        %1814 = vmatpush.bf16.msra.mxu0 0
        %1815 = vmatpush.bf16.msra.mxu0 0
        %1816 = vmatpush.bf16.msra.mxu0 0
        %1817 = vmatpush.bf16.msra.mxu0 0
        %1818 = vmatpush.bf16.msra.mxu0 %v1799
        %1819 = vmatmul.bf16.gmra.mxu0 %v1806
        %v1820 = vpop.f32.mrf.mxu0
        %v1821 = vadd.f32 0.0, %v1820
        %v1822 = vpop.f32.mrf.mxu0
        %v1823 = vadd.f32 0.0, %v1822
        %1824 = vmatmul.bf16.gmra.mxu0 %v1809
        %v1825 = vpop.f32.mrf.mxu0
        %v1826 = vadd.f32 0.0, %v1825
        %v1827 = vpop.f32.mrf.mxu0
        %v1828 = vadd.f32 0.0, %v1827
        %1829 = vdwg.mxu0
        %1830 = vmatpush.bf16.msra.mxu0 0
        %1831 = vmatpush.bf16.msra.mxu0 0
        %1832 = vmatpush.bf16.msra.mxu0 0
        %1833 = vmatpush.bf16.msra.mxu0 0
        %1834 = vmatpush.bf16.msra.mxu0 0
        %1835 = vmatpush.bf16.msra.mxu0 0
        %1836 = vmatpush.bf16.msra.mxu0 0
        %1837 = vmatpush.bf16.msra.mxu0 %v1800
        %1838 = vmatmul.bf16.gmra.mxu0 %v1806
        %v1839 = vpop.f32.mrf.mxu0
        %v1840 = vadd.f32 0.0, %v1839
        %v1841 = vpop.f32.mrf.mxu0
        %v1842 = vadd.f32 0.0, %v1841
        %1843 = vmatmul.bf16.gmra.mxu0 %v1809
        %v1844 = vpop.f32.mrf.mxu0
        %v1845 = vadd.f32 0.0, %v1844
        %v1846 = vpop.f32.mrf.mxu0
        %v1847 = vadd.f32 0.0, %v1846
        %1848 = vdwg.mxu0
        %1849 = vmatpush.bf16.msra.mxu0 0
        %1850 = vmatpush.bf16.msra.mxu0 0
        %1851 = vmatpush.bf16.msra.mxu0 0
        %1852 = vmatpush.bf16.msra.mxu0 0
        %1853 = vmatpush.bf16.msra.mxu0 0
        %1854 = vmatpush.bf16.msra.mxu0 0
        %1855 = vmatpush.bf16.msra.mxu0 0
        %1856 = vmatpush.bf16.msra.mxu0 %v1801
        %1857 = vmatmul.bf16.gmra.mxu0 %v1806
        %v1858 = vpop.f32.mrf.mxu0
        %v1859 = vadd.f32 0.0, %v1858
        %v1860 = vpop.f32.mrf.mxu0
        %v1861 = vadd.f32 0.0, %v1860
        %1862 = vmatmul.bf16.gmra.mxu0 %v1809
        %v1863 = vpop.f32.mrf.mxu0
        %v1864 = vadd.f32 0.0, %v1863
        %v1865 = vpop.f32.mrf.mxu0
        %v1866 = vadd.f32 0.0, %v1865
        %1867 = vdwg.mxu0
        %v1868 = vadd.f32 %v1775, %v1821
        %v1869 = vadd.f32 %v1776, %v1840
        %v1870 = vadd.f32 %v1777, %v1859
        %v1871 = vadd.f32 %v1778, %v1823
        %v1872 = vadd.f32 %v1779, %v1842
        %v1873 = vadd.f32 %v1780, %v1861
        %v1874 = vadd.f32 %v1781, %v1826
        %v1875 = vadd.f32 %v1782, %v1845
        %v1876 = vadd.f32 %v1783, %v1864
        %v1877 = vadd.f32 %v1784, %v1828
        %v1878 = vadd.f32 %v1785, %v1847
        %v1879 = vadd.f32 %v1786, %v1866
        %1880 = vrot.lane.b32.xlu0 %v1244, 16
        %v1881 = vpop.permute.xlu0 %1880
        %1882 = vrot.lane.b32.xlu0 %v1245, 16
        %v1883 = vpop.permute.xlu0 %1882
        %1884 = vrot.lane.b32.xlu0 %v1262, 79
        %v1885 = vpop.permute.xlu0 %1884
        %1886 = vrot.lane.b32.xlu0 %v1263, 79
        %v1887 = vpop.permute.xlu0 %1886
        %1888 = vrot.lane.b32.xlu0 %v1264, 79
        %v1889 = vpop.permute.xlu0 %1888
        %1890 = vrot.lane.b32.xlu0 %v1265, 79
        %v1891 = vpop.permute.xlu0 %1890
        %v1892 = vsel %vm981, %v1885, %v1887
        %v1893 = vsel %vm981, %v1887, %v1889
        %v1894 = vsel %vm981, %v1889, %v1891
        %v1899 = vsel %vm1280, %v1881, 0
        %v1902 = vsel %vm1280, %v1883, 0
        %1904 = vmatpush.bf16.msra.mxu0 0
        %1905 = vmatpush.bf16.msra.mxu0 0
        %1906 = vmatpush.bf16.msra.mxu0 0
        %1907 = vmatpush.bf16.msra.mxu0 0
        %1908 = vmatpush.bf16.msra.mxu0 0
        %1909 = vmatpush.bf16.msra.mxu0 0
        %1910 = vmatpush.bf16.msra.mxu0 0
        %1911 = vmatpush.bf16.msra.mxu0 %v1892
        %1912 = vmatmul.bf16.gmra.mxu0 %v1899
        %v1913 = vpop.f32.mrf.mxu0
        %v1914 = vadd.f32 0.0, %v1913
        %v1915 = vpop.f32.mrf.mxu0
        %v1916 = vadd.f32 0.0, %v1915
        %1917 = vmatmul.bf16.gmra.mxu0 %v1902
        %v1918 = vpop.f32.mrf.mxu0
        %v1919 = vadd.f32 0.0, %v1918
        %v1920 = vpop.f32.mrf.mxu0
        %v1921 = vadd.f32 0.0, %v1920
        %1922 = vdwg.mxu0
        %1923 = vmatpush.bf16.msra.mxu0 0
        %1924 = vmatpush.bf16.msra.mxu0 0
        %1925 = vmatpush.bf16.msra.mxu0 0
        %1926 = vmatpush.bf16.msra.mxu0 0
        %1927 = vmatpush.bf16.msra.mxu0 0
        %1928 = vmatpush.bf16.msra.mxu0 0
        %1929 = vmatpush.bf16.msra.mxu0 0
        %1930 = vmatpush.bf16.msra.mxu0 %v1893
        %1931 = vmatmul.bf16.gmra.mxu0 %v1899
        %v1932 = vpop.f32.mrf.mxu0
        %v1933 = vadd.f32 0.0, %v1932
        %v1934 = vpop.f32.mrf.mxu0
        %v1935 = vadd.f32 0.0, %v1934
        %1936 = vmatmul.bf16.gmra.mxu0 %v1902
        %v1937 = vpop.f32.mrf.mxu0
        %v1938 = vadd.f32 0.0, %v1937
        %v1939 = vpop.f32.mrf.mxu0
        %v1940 = vadd.f32 0.0, %v1939
        %1941 = vdwg.mxu0
        %1942 = vmatpush.bf16.msra.mxu0 0
        %1943 = vmatpush.bf16.msra.mxu0 0
        %1944 = vmatpush.bf16.msra.mxu0 0
        %1945 = vmatpush.bf16.msra.mxu0 0
        %1946 = vmatpush.bf16.msra.mxu0 0
        %1947 = vmatpush.bf16.msra.mxu0 0
        %1948 = vmatpush.bf16.msra.mxu0 0
        %1949 = vmatpush.bf16.msra.mxu0 %v1894
        %1950 = vmatmul.bf16.gmra.mxu0 %v1899
        %v1951 = vpop.f32.mrf.mxu0
        %v1952 = vadd.f32 0.0, %v1951
        %v1953 = vpop.f32.mrf.mxu0
        %v1954 = vadd.f32 0.0, %v1953
        %1955 = vmatmul.bf16.gmra.mxu0 %v1902
        %v1956 = vpop.f32.mrf.mxu0
        %v1957 = vadd.f32 0.0, %v1956
        %v1958 = vpop.f32.mrf.mxu0
        %v1959 = vadd.f32 0.0, %v1958
        %1960 = vdwg.mxu0
        %v1961 = vadd.f32 %v1868, %v1914
        %v1962 = vadd.f32 %v1869, %v1933
        %v1963 = vadd.f32 %v1870, %v1952
        %v1964 = vadd.f32 %v1871, %v1916
        %v1965 = vadd.f32 %v1872, %v1935
        %v1966 = vadd.f32 %v1873, %v1954
        %v1967 = vadd.f32 %v1874, %v1919
        %v1968 = vadd.f32 %v1875, %v1938
        %v1969 = vadd.f32 %v1876, %v1957
        %v1970 = vadd.f32 %v1877, %v1921
        %v1971 = vadd.f32 %v1878, %v1940
        %v1972 = vadd.f32 %v1879, %v1959
        %v1973 = vunpack.c.h.b16 %v273
        %v1974 = vunpack.c.h.b16 %v274
        %v1975 = vunpack.c.h.b16 %v275
        %v1976 = vunpack.c.h.b16 %v276
        %v1977 = vpack.c.b16 %v1974, %v1973
        %v1978 = vpack.c.b16 %v1976, %v1975
        %1979 = vrot.lane.b32.xlu0 %v1262, 78
        %v1980 = vpop.permute.xlu0 %1979
        %1981 = vrot.lane.b32.xlu0 %v1263, 78
        %v1982 = vpop.permute.xlu0 %1981
        %1983 = vrot.lane.b32.xlu0 %v1264, 78
        %v1984 = vpop.permute.xlu0 %1983
        %1985 = vrot.lane.b32.xlu0 %v1265, 78
        %v1986 = vpop.permute.xlu0 %1985
        %v1987 = vsel %vm1066, %v1980, %v1982
        %v1988 = vsel %vm1066, %v1982, %v1984
        %v1989 = vsel %vm1066, %v1984, %v1986
        %v1994 = vsel %vm1280, %v1977, 0
        %v1997 = vsel %vm1280, %v1978, 0
        %1999 = vmatpush.bf16.msra.mxu0 0
        %2000 = vmatpush.bf16.msra.mxu0 0
        %2001 = vmatpush.bf16.msra.mxu0 0
        %2002 = vmatpush.bf16.msra.mxu0 0
        %2003 = vmatpush.bf16.msra.mxu0 0
        %2004 = vmatpush.bf16.msra.mxu0 0
        %2005 = vmatpush.bf16.msra.mxu0 0
        %2006 = vmatpush.bf16.msra.mxu0 %v1987
        %2007 = vmatmul.bf16.gmra.mxu0 %v1994
        %v2008 = vpop.f32.mrf.mxu0
        %v2009 = vadd.f32 0.0, %v2008
        %v2010 = vpop.f32.mrf.mxu0
        %v2011 = vadd.f32 0.0, %v2010
        %2012 = vmatmul.bf16.gmra.mxu0 %v1997
        %v2013 = vpop.f32.mrf.mxu0
        %v2014 = vadd.f32 0.0, %v2013
        %v2015 = vpop.f32.mrf.mxu0
        %v2016 = vadd.f32 0.0, %v2015
        %2017 = vdwg.mxu0
        %2018 = vmatpush.bf16.msra.mxu0 0
        %2019 = vmatpush.bf16.msra.mxu0 0
        %2020 = vmatpush.bf16.msra.mxu0 0
        %2021 = vmatpush.bf16.msra.mxu0 0
        %2022 = vmatpush.bf16.msra.mxu0 0
        %2023 = vmatpush.bf16.msra.mxu0 0
        %2024 = vmatpush.bf16.msra.mxu0 0
        %2025 = vmatpush.bf16.msra.mxu0 %v1988
        %2026 = vmatmul.bf16.gmra.mxu0 %v1994
        %v2027 = vpop.f32.mrf.mxu0
        %v2028 = vadd.f32 0.0, %v2027
        %v2029 = vpop.f32.mrf.mxu0
        %v2030 = vadd.f32 0.0, %v2029
        %2031 = vmatmul.bf16.gmra.mxu0 %v1997
        %v2032 = vpop.f32.mrf.mxu0
        %v2033 = vadd.f32 0.0, %v2032
        %v2034 = vpop.f32.mrf.mxu0
        %v2035 = vadd.f32 0.0, %v2034
        %2036 = vdwg.mxu0
        %2037 = vmatpush.bf16.msra.mxu0 0
        %2038 = vmatpush.bf16.msra.mxu0 0
        %2039 = vmatpush.bf16.msra.mxu0 0
        %2040 = vmatpush.bf16.msra.mxu0 0
        %2041 = vmatpush.bf16.msra.mxu0 0
        %2042 = vmatpush.bf16.msra.mxu0 0
        %2043 = vmatpush.bf16.msra.mxu0 0
        %2044 = vmatpush.bf16.msra.mxu0 %v1989
        %2045 = vmatmul.bf16.gmra.mxu0 %v1994
        %v2046 = vpop.f32.mrf.mxu0
        %v2047 = vadd.f32 0.0, %v2046
        %v2048 = vpop.f32.mrf.mxu0
        %v2049 = vadd.f32 0.0, %v2048
        %2050 = vmatmul.bf16.gmra.mxu0 %v1997
        %v2051 = vpop.f32.mrf.mxu0
        %v2052 = vadd.f32 0.0, %v2051
        %v2053 = vpop.f32.mrf.mxu0
        %v2054 = vadd.f32 0.0, %v2053
        %2055 = vdwg.mxu0
        %v2056 = vadd.f32 %v1961, %v2009
        %v2057 = vadd.f32 %v1962, %v2028
        %v2058 = vadd.f32 %v1963, %v2047
        %v2059 = vadd.f32 %v1964, %v2011
        %v2060 = vadd.f32 %v1965, %v2030
        %v2061 = vadd.f32 %v1966, %v2049
        %v2062 = vadd.f32 %v1967, %v2014
        %v2063 = vadd.f32 %v1968, %v2033
        %v2064 = vadd.f32 %v1969, %v2052
        %v2065 = vadd.f32 %v1970, %v2016
        %v2066 = vadd.f32 %v1971, %v2035
        %v2067 = vadd.f32 %v1972, %v2054
        %2069 = vset.pattern.permute.xlu0 0
        %2070 = vperm.xlu0 %2069, %v279
        %v2071 = vpop.permute.xlu0 %2070
        %2074 = vset.pattern.permute.xlu0 0
        %2075 = vperm.xlu0 %2074, %v280
        %v2076 = vpop.permute.xlu0 %2075
        %2079 = vset.pattern.permute.xlu0 0
        %2080 = vperm.xlu0 %2079, %v281
        %v2081 = vpop.permute.xlu0 %2080
        %2084 = vset.pattern.permute.xlu0 0
        %2085 = vperm.xlu0 %2084, %v282
        %v2086 = vpop.permute.xlu0 %2085
        %v2088 = vadd.f32 %v2056, %v2071
        %v2089 = vadd.f32 %v2057, %v2071
        %v2090 = vadd.f32 %v2058, %v2071
        %v2091 = vadd.f32 %v2059, %v2076
        %v2092 = vadd.f32 %v2060, %v2076
        %v2093 = vadd.f32 %v2061, %v2076
        %v2094 = vadd.f32 %v2062, %v2081
        %v2095 = vadd.f32 %v2063, %v2081
        %v2096 = vadd.f32 %v2064, %v2081
        %v2097 = vadd.f32 %v2065, %v2086
        %v2098 = vadd.f32 %v2066, %v2086
        %v2099 = vadd.f32 %v2067, %v2086
        %2100 = vst [vmem:[%s259] sm:$0xff] %v2088
        %2101 = vst [vmem:[%s259 + $0x8] sm:$0xff] %v2089
        %2102 = vst [vmem:[%s259 + $0x10] sm:$0xff] %v2090
        %2103 = vst [vmem:[%s259 + $0x18] sm:$0xff] %v2091
        %2104 = vst [vmem:[%s259 + $0x20] sm:$0xff] %v2092
        %2105 = vst [vmem:[%s259 + $0x28] sm:$0xff] %v2093
        %2106 = vst [vmem:[%s259 + $0x30] sm:$0xff] %v2094
        %2107 = vst [vmem:[%s259 + $0x38] sm:$0xff] %v2095
        %2108 = vst [vmem:[%s259 + $0x40] sm:$0xff] %v2096
        %2109 = vst [vmem:[%s259 + $0x48] sm:$0xff] %v2097
        %2110 = vst [vmem:[%s259 + $0x50] sm:$0xff] %v2098
        %2111 = vst [vmem:[%s259 + $0x58] sm:$0xff] %v2099
        %s2112 = sand.u32 %s164, 1
        %s2113 = scalar_lea.sflag [#allocation4], %s2112
        %s2114 = sand.u32 %s164, 1
        %s2115 = smul.addr %s2114, 96
        %s2116 = scalar_lea.vmem [#allocation3], %s2115
        // Predicated region
        $region45: #{tpu_custom_call.1} parent=43 // pred_check
          %p2117 = pneg %p174
        $region46: #{tpu_custom_call.1} parent=43 // pred_check_branch
          %2119 = sbr.rel (%p2117) target = $region48
        $region47: #{tpu_custom_call.1} parent=43 // pred_region
          %2121 = vsyncadd %s2113, 0
          %s2122 = smul.addr %s20, 12
          %s2123 = smul.addr %s2122, 8
          %s2124 = scalar_lea.hbm %s6, %s2123
          %s2125 = sshll.u32 %s2116, 4
          %s2126 = int_to_ptr.vmem [resolvable:$true] %s2125
          %s2127 = sshll.u32 %s2124, 4
          %s2128 = int_to_ptr.hbm [resolvable:$true] %s2127
          %2133 = dma.vmem_to_hbm [thread:$0]  %s2126, 1536, %s2128, %s2113, 384, 384, 24
        $region48: #{tpu_custom_call.1} parent=43 // pred_fallthru
          _
      $region44: #{tpu_custom_call.1} parent=5 // pred_fallthru
        _
      %p2134 = scmp.le.s32.totalorder 2, %s15
      // Predicated region
      $region49: #{tpu_custom_call.1} parent=5 // pred_check
        %p2135 = pneg %p2134
      $region50: #{tpu_custom_call.1} parent=5 // pred_check_branch
        %2137 = sbr.rel (%p2135) target = $region52
      $region51: #{tpu_custom_call.1} parent=5 // pred_region
        %s2138 = ssub.s32 %s15, 2
        // Predicated region
        $region53: #{tpu_custom_call.1} parent=51 // pred_check
          %p2139 = pneg %p180
        $region54: #{tpu_custom_call.1} parent=51 // pred_check_branch
          %2141 = sbr.rel (%p2139) target = $region56
        $region55: #{tpu_custom_call.1} parent=51 // pred_region
          %s2142 = sand.u32 %s165, 1
          %s2143 = scalar_lea.sflag [#allocation4], %s2142
          %s2144 = sand.u32 %s165, 1
          %s2145 = smul.addr %s2144, 96
          %s2146 = scalar_lea.vmem [#allocation3], %s2145
          %2148 = dma.done %s2143, 1536
        $region56: #{tpu_custom_call.1} parent=51 // pred_fallthru
          _
      $region52: #{tpu_custom_call.1} parent=5 // pred_fallthru
        _
    $region6: #{tpu_custom_call.1} parent=1 // loop_footer
      %s19 = sadd.s32 1, %s15
    $region7: #{tpu_custom_call.1} parent=1 // loop_footer_branch
      %14 = sbr.rel target = $region3
    $region8: #{tpu_custom_call.1} parent=1 // loop_exit
      _
    %2149 = vsyncpa [#allocation4], 1
    %s2150 = scalar_lea.sflag [#allocation4], 1
    %2151 = vsyncpa %s2150, 1

</llo_original>
